<compile_context>
chip_gen: v5e
topology: v5e:2x2
jax: 0.10.0
libtpu: 0.0.40
codegen_flags: <defaults>
</compile_context>

<pallas_src>
import functools

import jax
import jax.numpy as jnp
from jax import lax
from jax.experimental import pallas as pl
from jax.experimental.pallas import tpu as pltpu


def _round_up(n, m):
    return ((n + m - 1) // m) * m


def _pick_chunk(seq_len, max_chunk):
    """Timesteps per grid step.  Prefer an exact divisor of seq_len (keeps the
    inner loop mask-free); otherwise pad the time axis and mask the tail."""
    if seq_len <= max_chunk:
        return seq_len
    for t in range(max_chunk, 0, -1):
        if seq_len % t == 0 and t >= max_chunk // 2:
            return t
    return max_chunk  # no decent divisor -> pad time + mask tail chunk


def lstm_kernel(x_ref, wih_ref, whh_ref, b_ref, hout_ref,
                xw_ref, h_ref, c_ref, *, seq_len, chunk_t, unroll):
    """One grid step == one chunk of `chunk_t` timesteps.

    x_ref:    (1, T*Bp, I)   chunk of inputs, time-major, batch padded to Bp
    wih_ref:  (I, 4*Hp)      W_ih^T, per-gate columns zero-padded H -> Hp
    whh_ref:  (Hp, 4*Hp)     W_hh^T, rows and per-gate columns zero-padded
    b_ref:    (1, 4*Hp)      bias_ih + bias_hh, per-gate zero-padded (f32)
    hout_ref: (Bp, Hp)       h at the final valid timestep (written on last chunk)
    xw_ref:   (T*Bp, 4*Hp)   f32 scratch: x @ W_ih + b for the whole chunk
    h_ref/c_ref: (Bp, Hp)    f32 recurrent state, persists across chunks
    """
    chunk = pl.program_id(0)
    Bp, Hp = h_ref.shape
    T = chunk_t

    @pl.when(chunk == 0)
    def _():
        h_ref[...] = jnp.zeros_like(h_ref)
        c_ref[...] = jnp.zeros_like(c_ref)

    # Fused, batched input projection for the whole chunk: one big MXU matmul,
    # bias broadcast folded in here (hoisted out of the recurrent loop).
    xw_ref[...] = (
        jnp.dot(x_ref[0], wih_ref[...], preferred_element_type=jnp.float32)
        + b_ref[...]
    )

    # Number of real (unpadded) timesteps in this chunk.  When seq_len divides
    # evenly this is statically T and no masking is emitted at all.
    tail = (seq_len % T) != 0
    n_valid = jnp.minimum(T, seq_len - chunk * T) if tail else None

    def step(t, carry):
        h, c = carry
        off = pl.multiple_of(t * Bp, Bp)
        # gates: (Bp, 4*Hp).  Recurrent matmul in the weights' dtype (bf16 fast
        # path on v6e/v7x), accumulation + state in f32.
        gates = xw_ref[pl.ds(off, Bp), :] + jnp.dot(
            h.astype(whh_ref.dtype), whh_ref[...],
            preferred_element_type=jnp.float32)
        # PyTorch gate order (i, f, g, o); slices are 128-lane aligned (Hp).
        i_g = jax.nn.sigmoid(gates[:, 0 * Hp:1 * Hp])
        f_g = jax.nn.sigmoid(gates[:, 1 * Hp:2 * Hp])
        g_g = jnp.tanh(gates[:, 2 * Hp:3 * Hp])
        o_g = jax.nn.sigmoid(gates[:, 3 * Hp:4 * Hp])
        c_new = f_g * c + i_g * g_g
        h_new = o_g * jnp.tanh(c_new)
        if n_valid is not None:  # padded tail steps: keep state unchanged
            keep = t < n_valid
            h_new = jnp.where(keep, h_new, h)
            c_new = jnp.where(keep, c_new, c)
        return h_new, c_new

    h, c = lax.fori_loop(0, T, step, (h_ref[...], c_ref[...]), unroll=unroll)
    h_ref[...] = h
    c_ref[...] = c

    @pl.when(chunk == pl.num_programs(0) - 1)
    def _():
        hout_ref[...] = h


@functools.partial(jax.jit, static_argnames=("compute_dtype", "max_chunk"))
def lstm_model_forward(x, params, *, compute_dtype=jnp.float32, max_chunk=64):
    """x: (batch, seq, input_size) float32 -> (batch, 1) float32."""
    B, S, I = x.shape
    H = params["w_hh"].shape[1]

    Bp = _round_up(B, 8)       # full sublanes / MXU rows
    Hp = _round_up(H, 128)     # 128-lane aligned gate slabs
    T = _pick_chunk(S, max_chunk)
    n_chunks = pl.cdiv(S, T)
    Sp = n_chunks * T          # padded seq length (== S when T divides S)

    def pad_gate_cols(w):  # (rows, 4H) -> (rows, 4*Hp), zero-pad each gate block
        r = w.shape[0]
        w4 = w.reshape(r, 4, H)
        w4 = jnp.pad(w4, ((0, 0), (0, 0), (0, Hp - H)))
        return w4.reshape(r, 4 * Hp)

    wih_t = pad_gate_cols(params["w_ih"].T).astype(compute_dtype)        # (I, 4Hp)
    whh_t = pad_gate_cols(params["w_hh"].T)                              # (H, 4Hp)
    whh_t = jnp.pad(whh_t, ((0, Hp - H), (0, 0))).astype(compute_dtype)  # (Hp, 4Hp)
    bias = (params["b_ih"] + params["b_hh"]).reshape(4, H)
    bias = jnp.pad(bias, ((0, 0), (0, Hp - H))).reshape(1, 4 * Hp)
    bias = bias.astype(jnp.float32)

    # (B, S, I) -> (Sp, Bp, I) time-major, zero-padded -> (n_chunks, T*Bp, I)
    x_tbi = jnp.transpose(x, (1, 0, 2))
    x_tbi = jnp.pad(x_tbi, ((0, Sp - S), (0, Bp - B), (0, 0)))
    x_chunks = x_tbi.reshape(n_chunks, T * Bp, I).astype(compute_dtype)

    kernel = functools.partial(lstm_kernel, seq_len=S, chunk_t=T,
                               unroll=(T <= 32))

    h_last = pl.pallas_call(
        kernel,
        out_shape=jax.ShapeDtypeStruct((Bp, Hp), jnp.float32),
        grid_spec=pltpu.PrefetchScalarGridSpec(
            num_scalar_prefetch=0,
            grid=(n_chunks,),
            in_specs=[
                pl.BlockSpec((1, T * Bp, I), lambda c: (c, 0, 0)),
                # Time-invariant operands (constant index maps; for large H add
                # pipeline_mode=pl.Buffered(1) and/or bf16 to fit v7x 64 MiB).
                pl.BlockSpec((I, 4 * Hp), lambda c: (0, 0)),
                pl.BlockSpec((Hp, 4 * Hp), lambda c: (0, 0)),
                pl.BlockSpec((1, 4 * Hp), lambda c: (0, 0)),
            ],
            out_specs=pl.BlockSpec((Bp, Hp), lambda c: (0, 0)),
            scratch_shapes=[
                pltpu.VMEM((T * Bp, 4 * Hp), jnp.float32),  # chunk input proj
                pltpu.VMEM((Bp, Hp), jnp.float32),          # h state
                pltpu.VMEM((Bp, Hp), jnp.float32),          # c state
            ],
        ),
        compiler_params=pltpu.CompilerParams(
            dimension_semantics=("arbitrary",)),  # sequential recurrence in time
    )(x_chunks, wih_t, whh_t, bias)

    # Linear(hidden, 1) on the last-timestep hidden state, done in the wrapper
    # (an N=1 matmul + lane-width-1 store would waste the MXU / force masked
    # stores in-kernel); fuses into the same jitted program.
    h_valid = h_last[:B, :H]
    return h_valid @ params["fc_w"].T + params["fc_b"]


def reference_forward(x, params):
    """Pure-JAX reference matching PyTorch nn.LSTM + Linear semantics."""
    B, S, I = x.shape
    Hh = params["w_hh"].shape[1]
    wih, whh = params["w_ih"], params["w_hh"]
    b = params["b_ih"] + params["b_hh"]

    def step(carry, x_t):
        h, c = carry
        gates = x_t @ wih.T + h @ whh.T + b
        i_g = jax.nn.sigmoid(gates[:, 0 * Hh:1 * Hh])
        f_g = jax.nn.sigmoid(gates[:, 1 * Hh:2 * Hh])
        g_g = jnp.tanh(gates[:, 2 * Hh:3 * Hh])
        o_g = jax.nn.sigmoid(gates[:, 3 * Hh:4 * Hh])
        c_new = f_g * c + i_g * g_g
        h_new = o_g * jnp.tanh(c_new)
        return (h_new, c_new), None

    h0 = jnp.zeros((B, Hh), jnp.float32)
    c0 = jnp.zeros((B, Hh), jnp.float32)
    (h_last, _), _ = lax.scan(step, (h0, c0), jnp.transpose(x, (1, 0, 2)))
    return h_last @ params["fc_w"].T + params["fc_b"]


def init_params(key, input_size, hidden_size):
    ks = jax.random.split(key, 6)
    scale = 1.0 / jnp.sqrt(hidden_size)
    return {
        "w_ih": jax.random.uniform(ks[0], (4 * hidden_size, input_size),
                                   jnp.float32, -scale, scale),
        "w_hh": jax.random.uniform(ks[1], (4 * hidden_size, hidden_size),
                                   jnp.float32, -scale, scale),
        "b_ih": jax.random.uniform(ks[2], (4 * hidden_size,),
                                   jnp.float32, -scale, scale),
        "b_hh": jax.random.uniform(ks[3], (4 * hidden_size,),
                                   jnp.float32, -scale, scale),
        "fc_w": jax.random.uniform(ks[4], (1, hidden_size),
                                   jnp.float32, -scale, scale),
        "fc_b": jax.random.uniform(ks[5], (1,),
                                   jnp.float32, -scale, scale),
    }


if __name__ == "__main__":
    B, S, I, H = 2, 8, 8, 32
    key = jax.random.PRNGKey(0)
    k_x, k_p, k_x2 = jax.random.split(key, 3)
    x = jax.random.normal(k_x, (B, S, I), jnp.float32)
    params = init_params(k_p, I, H)

    ref = reference_forward(x, params)

    # f32 path: exact semantics check.
    out = jax.block_until_ready(lstm_model_forward(x, params))
    assert out.shape == (B, 1)
    assert jnp.allclose(out, ref, atol=1e-5, rtol=1e-5), (out, ref)

    # bf16 MXU fast path (v6e/v7x): x/weights bf16, state + accumulation f32.
    out_bf16 = jax.block_until_ready(
        lstm_model_forward(x, params, compute_dtype=jnp.bfloat16))
    assert out_bf16.shape == (B, 1)
    assert bool(jnp.all(jnp.isfinite(out_bf16)))
    assert jnp.allclose(out_bf16, ref, atol=0.15, rtol=0.15), (out_bf16, ref)

    # Long, non-divisible sequence: exercises multi-chunk pipelining and the
    # masked tail-chunk path (S=67 prime -> T=64, padded + masked last chunk).
    S2 = 67
    x2 = jax.random.normal(k_x2, (B, S2, I), jnp.float32)
    ref2 = reference_forward(x2, params)
    out2 = jax.block_until_ready(lstm_model_forward(x2, params))
    assert out2.shape == (B, 1)
    assert jnp.allclose(out2, ref2, atol=1e-4, rtol=1e-4), (out2, ref2)

    print("KERNEL_OK")
</pallas_src>

<mosaic_0001>
module attributes {stable_mosaic.version = 11 : i64} {
  func.func @lstm_kernel(%arg0: i32, %arg1: memref<1x64x8xf32, #tpu.memory_space<vmem>>, %arg2: memref<8x512xf32, #tpu.memory_space<vmem>>, %arg3: memref<128x512xf32, #tpu.memory_space<vmem>>, %arg4: memref<1x512xf32, #tpu.memory_space<vmem>>, %arg5: memref<8x128xf32, #tpu.memory_space<vmem>>, %arg6: memref<64x512xf32, #tpu.memory_space<vmem>>, %arg7: memref<8x128xf32, #tpu.memory_space<vmem>>, %arg8: memref<8x128xf32, #tpu.memory_space<vmem>>) attributes {dimension_semantics = [#tpu.dimension_semantics<arbitrary>], iteration_bounds = array<i64: 1>, scalar_prefetch = 0 : i64, scratch_operands = 3 : i64, tpu.core_type = #tpu.core_type<tc>, window_params = [{transform_indices = @transform_0, window_bounds = array<i64: 1, 64, 8>}, {pipeline_mode = #tpu.pipeline_mode<synchronous>, transform_indices = @transform_1, window_bounds = array<i64: 8, 512>}, {pipeline_mode = #tpu.pipeline_mode<synchronous>, transform_indices = @transform_2, window_bounds = array<i64: 128, 512>}, {pipeline_mode = #tpu.pipeline_mode<synchronous>, transform_indices = @transform_3, window_bounds = array<i64: 1, 512>}, {pipeline_mode = #tpu.pipeline_mode<synchronous>, transform_indices = @transform_4, window_bounds = array<i64: 8, 128>}]} {
    %c0_i32 = arith.constant 0 : i32
    %0 = arith.cmpi eq, %arg0, %c0_i32 : i32
    %1 = arith.extui %0 : i1 to i32
    %c0_i32_0 = arith.constant 0 : i32
    %2 = arith.cmpi ne, %1, %c0_i32_0 : i32
    scf.if %2 {
      %cst_84 = arith.constant 0.000000e+00 : f32
      %274 = vector.broadcast %cst_84 : f32 to vector<8x128xf32>
      %c0_85 = arith.constant 0 : index
      %c0_86 = arith.constant 0 : index
      %275 = vector.load %arg7[%c0_85, %c0_86] : memref<8x128xf32, #tpu.memory_space<vmem>>, vector<8x128xf32>
      tpu.vector_store %arg7[%c0_85, %c0_86], %274 {strides = array<i32>} : memref<8x128xf32, #tpu.memory_space<vmem>>, vector<8x128xf32>,
      %cst_87 = arith.constant 0.000000e+00 : f32
      %276 = vector.broadcast %cst_87 : f32 to vector<8x128xf32>
      %c0_88 = arith.constant 0 : index
      %c0_89 = arith.constant 0 : index
      %277 = vector.load %arg8[%c0_88, %c0_89] : memref<8x128xf32, #tpu.memory_space<vmem>>, vector<8x128xf32>
      tpu.vector_store %arg8[%c0_88, %c0_89], %276 {strides = array<i32>} : memref<8x128xf32, #tpu.memory_space<vmem>>, vector<8x128xf32>,
    } else {
    }
    %c0 = arith.constant 0 : index
    %c0_1 = arith.constant 0 : index
    %c0_2 = arith.constant 0 : index
    %3 = vector.load %arg1[%c0, %c0_1, %c0_2] : memref<1x64x8xf32, #tpu.memory_space<vmem>>, vector<1x64x8xf32>
    %4 = vector.shape_cast %3 : vector<1x64x8xf32> to vector<64x8xf32>
    %c0_3 = arith.constant 0 : index
    %c0_4 = arith.constant 0 : index
    %5 = vector.load %arg2[%c0_3, %c0_4] : memref<8x512xf32, #tpu.memory_space<vmem>>, vector<8x512xf32>
    %cst = arith.constant dense<0.000000e+00> : vector<64x512xf32>
    %6 = tpu.matmul %4, %5, %cst {dimension_numbers = #tpu.dot_dimension_numbers<[1], [0], [0], [1], [0, 0, 1, 1], [], []>} : vector<64x8xf32>, vector<8x512xf32>, vector<64x512xf32> -> vector<64x512xf32>
    %c0_5 = arith.constant 0 : index
    %c0_6 = arith.constant 0 : index
    %7 = vector.load %arg4[%c0_5, %c0_6] : memref<1x512xf32, #tpu.memory_space<vmem>>, vector<1x512xf32>
    %8 = vector.broadcast %7 : vector<1x512xf32> to vector<64x512xf32>
    %9 = arith.addf %6, %8 : vector<64x512xf32>
    %c0_7 = arith.constant 0 : index
    %c0_8 = arith.constant 0 : index
    %10 = vector.load %arg6[%c0_7, %c0_8] : memref<64x512xf32, #tpu.memory_space<vmem>>, vector<64x512xf32>
    tpu.vector_store %arg6[%c0_7, %c0_8], %9 {strides = array<i32>} : memref<64x512xf32, #tpu.memory_space<vmem>>, vector<64x512xf32>,
    %c0_9 = arith.constant 0 : index
    %c0_10 = arith.constant 0 : index
    %11 = vector.load %arg7[%c0_9, %c0_10] : memref<8x128xf32, #tpu.memory_space<vmem>>, vector<8x128xf32>
    %c0_11 = arith.constant 0 : index
    %c0_12 = arith.constant 0 : index
    %12 = vector.load %arg8[%c0_11, %c0_12] : memref<8x128xf32, #tpu.memory_space<vmem>>, vector<8x128xf32>
    %c0_i32_13 = arith.constant 0 : i32
    %c8_i32 = arith.constant 8 : i32
    %13 = arith.muli %c0_i32_13, %c8_i32 : i32
    %14 = tpu.assume_multiple %13, 8 : i32
    %15 = arith.index_cast %14 : i32 to index
    %c0_14 = arith.constant 0 : index
    %16 = vector.load %arg6[%15, %c0_14] : memref<64x512xf32, #tpu.memory_space<vmem>>, vector<8x512xf32>
    %c0_15 = arith.constant 0 : index
    %c0_16 = arith.constant 0 : index
    %17 = vector.load %arg3[%c0_15, %c0_16] : memref<128x512xf32, #tpu.memory_space<vmem>>, vector<128x512xf32>
    %cst_17 = arith.constant dense<0.000000e+00> : vector<8x512xf32>
    %18 = tpu.matmul %11, %17, %cst_17 {dimension_numbers = #tpu.dot_dimension_numbers<[1], [0], [0], [1], [0, 0, 1, 1], [], []>} : vector<8x128xf32>, vector<128x512xf32>, vector<8x512xf32> -> vector<8x512xf32>
    %19 = arith.addf %16, %18 : vector<8x512xf32>
    %20 = vector.extract_strided_slice %19 {offsets = [0, 0], sizes = [8, 128], strides = [1, 1]} : vector<8x512xf32> to vector<8x128xf32>
    %21 = arith.negf %20 : vector<8x128xf32>
    %22 = math.exp %21 : vector<8x128xf32>
    %cst_18 = arith.constant 1.000000e+00 : f32
    %23 = vector.broadcast %cst_18 : f32 to vector<8x128xf32>
    %24 = arith.addf %23, %22 : vector<8x128xf32>
    %25 = arith.divf %23, %24 : vector<8x128xf32>
    %26 = vector.extract_strided_slice %19 {offsets = [0, 128], sizes = [8, 128], strides = [1, 1]} : vector<8x512xf32> to vector<8x128xf32>
    %27 = arith.negf %26 : vector<8x128xf32>
    %28 = math.exp %27 : vector<8x128xf32>
    %cst_19 = arith.constant 1.000000e+00 : f32
    %29 = vector.broadcast %cst_19 : f32 to vector<8x128xf32>
    %30 = arith.addf %29, %28 : vector<8x128xf32>
    %31 = arith.divf %29, %30 : vector<8x128xf32>
    %32 = vector.extract_strided_slice %19 {offsets = [0, 256], sizes = [8, 128], strides = [1, 1]} : vector<8x512xf32> to vector<8x128xf32>
    %33 = math.tanh %32 : vector<8x128xf32>
    %34 = vector.extract_strided_slice %19 {offsets = [0, 384], sizes = [8, 128], strides = [1, 1]} : vector<8x512xf32> to vector<8x128xf32>
    %35 = arith.negf %34 : vector<8x128xf32>
    %36 = math.exp %35 : vector<8x128xf32>
    %cst_20 = arith.constant 1.000000e+00 : f32
    %37 = vector.broadcast %cst_20 : f32 to vector<8x128xf32>
    %38 = arith.addf %37, %36 : vector<8x128xf32>
    %39 = arith.divf %37, %38 : vector<8x128xf32>
    %40 = arith.mulf %31, %12 : vector<8x128xf32>
    %41 = arith.mulf %25, %33 : vector<8x128xf32>
    %42 = arith.addf %40, %41 : vector<8x128xf32>
    %43 = math.tanh %42 : vector<8x128xf32>
    %44 = arith.mulf %39, %43 : vector<8x128xf32>
    %c1_i32 = arith.constant 1 : i32
    %c8_i32_21 = arith.constant 8 : i32
    %45 = arith.muli %c1_i32, %c8_i32_21 : i32
    %46 = tpu.assume_multiple %45, 8 : i32
    %47 = arith.index_cast %46 : i32 to index
    %c0_22 = arith.constant 0 : index
    %48 = vector.load %arg6[%47, %c0_22] : memref<64x512xf32, #tpu.memory_space<vmem>>, vector<8x512xf32>
    %c0_23 = arith.constant 0 : index
    %c0_24 = arith.constant 0 : index
    %49 = vector.load %arg3[%c0_23, %c0_24] : memref<128x512xf32, #tpu.memory_space<vmem>>, vector<128x512xf32>
    %cst_25 = arith.constant dense<0.000000e+00> : vector<8x512xf32>
    %50 = tpu.matmul %44, %49, %cst_25 {dimension_numbers = #tpu.dot_dimension_numbers<[1], [0], [0], [1], [0, 0, 1, 1], [], []>} : vector<8x128xf32>, vector<128x512xf32>, vector<8x512xf32> -> vector<8x512xf32>
    %51 = arith.addf %48, %50 : vector<8x512xf32>
    %52 = vector.extract_strided_slice %51 {offsets = [0, 0], sizes = [8, 128], strides = [1, 1]} : vector<8x512xf32> to vector<8x128xf32>
    %53 = arith.negf %52 : vector<8x128xf32>
    %54 = math.exp %53 : vector<8x128xf32>
    %cst_26 = arith.constant 1.000000e+00 : f32
    %55 = vector.broadcast %cst_26 : f32 to vector<8x128xf32>
    %56 = arith.addf %55, %54 : vector<8x128xf32>
    %57 = arith.divf %55, %56 : vector<8x128xf32>
    %58 = vector.extract_strided_slice %51 {offsets = [0, 128], sizes = [8, 128], strides = [1, 1]} : vector<8x512xf32> to vector<8x128xf32>
    %59 = arith.negf %58 : vector<8x128xf32>
    %60 = math.exp %59 : vector<8x128xf32>
    %cst_27 = arith.constant 1.000000e+00 : f32
    %61 = vector.broadcast %cst_27 : f32 to vector<8x128xf32>
    %62 = arith.addf %61, %60 : vector<8x128xf32>
    %63 = arith.divf %61, %62 : vector<8x128xf32>
    %64 = vector.extract_strided_slice %51 {offsets = [0, 256], sizes = [8, 128], strides = [1, 1]} : vector<8x512xf32> to vector<8x128xf32>
    %65 = math.tanh %64 : vector<8x128xf32>
    %66 = vector.extract_strided_slice %51 {offsets = [0, 384], sizes = [8, 128], strides = [1, 1]} : vector<8x512xf32> to vector<8x128xf32>
    %67 = arith.negf %66 : vector<8x128xf32>
    %68 = math.exp %67 : vector<8x128xf32>
    %cst_28 = arith.constant 1.000000e+00 : f32
    %69 = vector.broadcast %cst_28 : f32 to vector<8x128xf32>
    %70 = arith.addf %69, %68 : vector<8x128xf32>
    %71 = arith.divf %69, %70 : vector<8x128xf32>
    %72 = arith.mulf %63, %42 : vector<8x128xf32>
    %73 = arith.mulf %57, %65 : vector<8x128xf32>
    %74 = arith.addf %72, %73 : vector<8x128xf32>
    %75 = math.tanh %74 : vector<8x128xf32>
    %76 = arith.mulf %71, %75 : vector<8x128xf32>
    %c2_i32 = arith.constant 2 : i32
    %c8_i32_29 = arith.constant 8 : i32
    %77 = arith.muli %c2_i32, %c8_i32_29 : i32
    %78 = tpu.assume_multiple %77, 8 : i32
    %79 = arith.index_cast %78 : i32 to index
    %c0_30 = arith.constant 0 : index
    %80 = vector.load %arg6[%79, %c0_30] : memref<64x512xf32, #tpu.memory_space<vmem>>, vector<8x512xf32>
    %c0_31 = arith.constant 0 : index
    %c0_32 = arith.constant 0 : index
    %81 = vector.load %arg3[%c0_31, %c0_32] : memref<128x512xf32, #tpu.memory_space<vmem>>, vector<128x512xf32>
    %cst_33 = arith.constant dense<0.000000e+00> : vector<8x512xf32>
    %82 = tpu.matmul %76, %81, %cst_33 {dimension_numbers = #tpu.dot_dimension_numbers<[1], [0], [0], [1], [0, 0, 1, 1], [], []>} : vector<8x128xf32>, vector<128x512xf32>, vector<8x512xf32> -> vector<8x512xf32>
    %83 = arith.addf %80, %82 : vector<8x512xf32>
    %84 = vector.extract_strided_slice %83 {offsets = [0, 0], sizes = [8, 128], strides = [1, 1]} : vector<8x512xf32> to vector<8x128xf32>
    %85 = arith.negf %84 : vector<8x128xf32>
    %86 = math.exp %85 : vector<8x128xf32>
    %cst_34 = arith.constant 1.000000e+00 : f32
    %87 = vector.broadcast %cst_34 : f32 to vector<8x128xf32>
    %88 = arith.addf %87, %86 : vector<8x128xf32>
    %89 = arith.divf %87, %88 : vector<8x128xf32>
    %90 = vector.extract_strided_slice %83 {offsets = [0, 128], sizes = [8, 128], strides = [1, 1]} : vector<8x512xf32> to vector<8x128xf32>
    %91 = arith.negf %90 : vector<8x128xf32>
    %92 = math.exp %91 : vector<8x128xf32>
    %cst_35 = arith.constant 1.000000e+00 : f32
    %93 = vector.broadcast %cst_35 : f32 to vector<8x128xf32>
    %94 = arith.addf %93, %92 : vector<8x128xf32>
    %95 = arith.divf %93, %94 : vector<8x128xf32>
    %96 = vector.extract_strided_slice %83 {offsets = [0, 256], sizes = [8, 128], strides = [1, 1]} : vector<8x512xf32> to vector<8x128xf32>
    %97 = math.tanh %96 : vector<8x128xf32>
    %98 = vector.extract_strided_slice %83 {offsets = [0, 384], sizes = [8, 128], strides = [1, 1]} : vector<8x512xf32> to vector<8x128xf32>
    %99 = arith.negf %98 : vector<8x128xf32>
    %100 = math.exp %99 : vector<8x128xf32>
    %cst_36 = arith.constant 1.000000e+00 : f32
    %101 = vector.broadcast %cst_36 : f32 to vector<8x128xf32>
    %102 = arith.addf %101, %100 : vector<8x128xf32>
    %103 = arith.divf %101, %102 : vector<8x128xf32>
    %104 = arith.mulf %95, %74 : vector<8x128xf32>
    %105 = arith.mulf %89, %97 : vector<8x128xf32>
    %106 = arith.addf %104, %105 : vector<8x128xf32>
    %107 = math.tanh %106 : vector<8x128xf32>
    %108 = arith.mulf %103, %107 : vector<8x128xf32>
    %c3_i32 = arith.constant 3 : i32
    %c8_i32_37 = arith.constant 8 : i32
    %109 = arith.muli %c3_i32, %c8_i32_37 : i32
    %110 = tpu.assume_multiple %109, 8 : i32
    %111 = arith.index_cast %110 : i32 to index
    %c0_38 = arith.constant 0 : index
    %112 = vector.load %arg6[%111, %c0_38] : memref<64x512xf32, #tpu.memory_space<vmem>>, vector<8x512xf32>
    %c0_39 = arith.constant 0 : index
    %c0_40 = arith.constant 0 : index
    %113 = vector.load %arg3[%c0_39, %c0_40] : memref<128x512xf32, #tpu.memory_space<vmem>>, vector<128x512xf32>
    %cst_41 = arith.constant dense<0.000000e+00> : vector<8x512xf32>
    %114 = tpu.matmul %108, %113, %cst_41 {dimension_numbers = #tpu.dot_dimension_numbers<[1], [0], [0], [1], [0, 0, 1, 1], [], []>} : vector<8x128xf32>, vector<128x512xf32>, vector<8x512xf32> -> vector<8x512xf32>
    %115 = arith.addf %112, %114 : vector<8x512xf32>
    %116 = vector.extract_strided_slice %115 {offsets = [0, 0], sizes = [8, 128], strides = [1, 1]} : vector<8x512xf32> to vector<8x128xf32>
    %117 = arith.negf %116 : vector<8x128xf32>
    %118 = math.exp %117 : vector<8x128xf32>
    %cst_42 = arith.constant 1.000000e+00 : f32
    %119 = vector.broadcast %cst_42 : f32 to vector<8x128xf32>
    %120 = arith.addf %119, %118 : vector<8x128xf32>
    %121 = arith.divf %119, %120 : vector<8x128xf32>
    %122 = vector.extract_strided_slice %115 {offsets = [0, 128], sizes = [8, 128], strides = [1, 1]} : vector<8x512xf32> to vector<8x128xf32>
    %123 = arith.negf %122 : vector<8x128xf32>
    %124 = math.exp %123 : vector<8x128xf32>
    %cst_43 = arith.constant 1.000000e+00 : f32
    %125 = vector.broadcast %cst_43 : f32 to vector<8x128xf32>
    %126 = arith.addf %125, %124 : vector<8x128xf32>
    %127 = arith.divf %125, %126 : vector<8x128xf32>
    %128 = vector.extract_strided_slice %115 {offsets = [0, 256], sizes = [8, 128], strides = [1, 1]} : vector<8x512xf32> to vector<8x128xf32>
    %129 = math.tanh %128 : vector<8x128xf32>
    %130 = vector.extract_strided_slice %115 {offsets = [0, 384], sizes = [8, 128], strides = [1, 1]} : vector<8x512xf32> to vector<8x128xf32>
    %131 = arith.negf %130 : vector<8x128xf32>
    %132 = math.exp %131 : vector<8x128xf32>
    %cst_44 = arith.constant 1.000000e+00 : f32
    %133 = vector.broadcast %cst_44 : f32 to vector<8x128xf32>
    %134 = arith.addf %133, %132 : vector<8x128xf32>
    %135 = arith.divf %133, %134 : vector<8x128xf32>
    %136 = arith.mulf %127, %106 : vector<8x128xf32>
    %137 = arith.mulf %121, %129 : vector<8x128xf32>
    %138 = arith.addf %136, %137 : vector<8x128xf32>
    %139 = math.tanh %138 : vector<8x128xf32>
    %140 = arith.mulf %135, %139 : vector<8x128xf32>
    %c4_i32 = arith.constant 4 : i32
    %c8_i32_45 = arith.constant 8 : i32
    %141 = arith.muli %c4_i32, %c8_i32_45 : i32
    %142 = tpu.assume_multiple %141, 8 : i32
    %143 = arith.index_cast %142 : i32 to index
    %c0_46 = arith.constant 0 : index
    %144 = vector.load %arg6[%143, %c0_46] : memref<64x512xf32, #tpu.memory_space<vmem>>, vector<8x512xf32>
    %c0_47 = arith.constant 0 : index
    %c0_48 = arith.constant 0 : index
    %145 = vector.load %arg3[%c0_47, %c0_48] : memref<128x512xf32, #tpu.memory_space<vmem>>, vector<128x512xf32>
    %cst_49 = arith.constant dense<0.000000e+00> : vector<8x512xf32>
    %146 = tpu.matmul %140, %145, %cst_49 {dimension_numbers = #tpu.dot_dimension_numbers<[1], [0], [0], [1], [0, 0, 1, 1], [], []>} : vector<8x128xf32>, vector<128x512xf32>, vector<8x512xf32> -> vector<8x512xf32>
    %147 = arith.addf %144, %146 : vector<8x512xf32>
    %148 = vector.extract_strided_slice %147 {offsets = [0, 0], sizes = [8, 128], strides = [1, 1]} : vector<8x512xf32> to vector<8x128xf32>
    %149 = arith.negf %148 : vector<8x128xf32>
    %150 = math.exp %149 : vector<8x128xf32>
    %cst_50 = arith.constant 1.000000e+00 : f32
    %151 = vector.broadcast %cst_50 : f32 to vector<8x128xf32>
    %152 = arith.addf %151, %150 : vector<8x128xf32>
    %153 = arith.divf %151, %152 : vector<8x128xf32>
    %154 = vector.extract_strided_slice %147 {offsets = [0, 128], sizes = [8, 128], strides = [1, 1]} : vector<8x512xf32> to vector<8x128xf32>
    %155 = arith.negf %154 : vector<8x128xf32>
    %156 = math.exp %155 : vector<8x128xf32>
    %cst_51 = arith.constant 1.000000e+00 : f32
    %157 = vector.broadcast %cst_51 : f32 to vector<8x128xf32>
    %158 = arith.addf %157, %156 : vector<8x128xf32>
    %159 = arith.divf %157, %158 : vector<8x128xf32>
    %160 = vector.extract_strided_slice %147 {offsets = [0, 256], sizes = [8, 128], strides = [1, 1]} : vector<8x512xf32> to vector<8x128xf32>
    %161 = math.tanh %160 : vector<8x128xf32>
    %162 = vector.extract_strided_slice %147 {offsets = [0, 384], sizes = [8, 128], strides = [1, 1]} : vector<8x512xf32> to vector<8x128xf32>
    %163 = arith.negf %162 : vector<8x128xf32>
    %164 = math.exp %163 : vector<8x128xf32>
    %cst_52 = arith.constant 1.000000e+00 : f32
    %165 = vector.broadcast %cst_52 : f32 to vector<8x128xf32>
    %166 = arith.addf %165, %164 : vector<8x128xf32>
    %167 = arith.divf %165, %166 : vector<8x128xf32>
    %168 = arith.mulf %159, %138 : vector<8x128xf32>
    %169 = arith.mulf %153, %161 : vector<8x128xf32>
    %170 = arith.addf %168, %169 : vector<8x128xf32>
    %171 = math.tanh %170 : vector<8x128xf32>
    %172 = arith.mulf %167, %171 : vector<8x128xf32>
    %c5_i32 = arith.constant 5 : i32
    %c8_i32_53 = arith.constant 8 : i32
    %173 = arith.muli %c5_i32, %c8_i32_53 : i32
    %174 = tpu.assume_multiple %173, 8 : i32
    %175 = arith.index_cast %174 : i32 to index
    %c0_54 = arith.constant 0 : index
    %176 = vector.load %arg6[%175, %c0_54] : memref<64x512xf32, #tpu.memory_space<vmem>>, vector<8x512xf32>
    %c0_55 = arith.constant 0 : index
    %c0_56 = arith.constant 0 : index
    %177 = vector.load %arg3[%c0_55, %c0_56] : memref<128x512xf32, #tpu.memory_space<vmem>>, vector<128x512xf32>
    %cst_57 = arith.constant dense<0.000000e+00> : vector<8x512xf32>
    %178 = tpu.matmul %172, %177, %cst_57 {dimension_numbers = #tpu.dot_dimension_numbers<[1], [0], [0], [1], [0, 0, 1, 1], [], []>} : vector<8x128xf32>, vector<128x512xf32>, vector<8x512xf32> -> vector<8x512xf32>
    %179 = arith.addf %176, %178 : vector<8x512xf32>
    %180 = vector.extract_strided_slice %179 {offsets = [0, 0], sizes = [8, 128], strides = [1, 1]} : vector<8x512xf32> to vector<8x128xf32>
    %181 = arith.negf %180 : vector<8x128xf32>
    %182 = math.exp %181 : vector<8x128xf32>
    %cst_58 = arith.constant 1.000000e+00 : f32
    %183 = vector.broadcast %cst_58 : f32 to vector<8x128xf32>
    %184 = arith.addf %183, %182 : vector<8x128xf32>
    %185 = arith.divf %183, %184 : vector<8x128xf32>
    %186 = vector.extract_strided_slice %179 {offsets = [0, 128], sizes = [8, 128], strides = [1, 1]} : vector<8x512xf32> to vector<8x128xf32>
    %187 = arith.negf %186 : vector<8x128xf32>
    %188 = math.exp %187 : vector<8x128xf32>
    %cst_59 = arith.constant 1.000000e+00 : f32
    %189 = vector.broadcast %cst_59 : f32 to vector<8x128xf32>
    %190 = arith.addf %189, %188 : vector<8x128xf32>
    %191 = arith.divf %189, %190 : vector<8x128xf32>
    %192 = vector.extract_strided_slice %179 {offsets = [0, 256], sizes = [8, 128], strides = [1, 1]} : vector<8x512xf32> to vector<8x128xf32>
    %193 = math.tanh %192 : vector<8x128xf32>
    %194 = vector.extract_strided_slice %179 {offsets = [0, 384], sizes = [8, 128], strides = [1, 1]} : vector<8x512xf32> to vector<8x128xf32>
    %195 = arith.negf %194 : vector<8x128xf32>
    %196 = math.exp %195 : vector<8x128xf32>
    %cst_60 = arith.constant 1.000000e+00 : f32
    %197 = vector.broadcast %cst_60 : f32 to vector<8x128xf32>
    %198 = arith.addf %197, %196 : vector<8x128xf32>
    %199 = arith.divf %197, %198 : vector<8x128xf32>
    %200 = arith.mulf %191, %170 : vector<8x128xf32>
    %201 = arith.mulf %185, %193 : vector<8x128xf32>
    %202 = arith.addf %200, %201 : vector<8x128xf32>
    %203 = math.tanh %202 : vector<8x128xf32>
    %204 = arith.mulf %199, %203 : vector<8x128xf32>
    %c6_i32 = arith.constant 6 : i32
    %c8_i32_61 = arith.constant 8 : i32
    %205 = arith.muli %c6_i32, %c8_i32_61 : i32
    %206 = tpu.assume_multiple %205, 8 : i32
    %207 = arith.index_cast %206 : i32 to index
    %c0_62 = arith.constant 0 : index
    %208 = vector.load %arg6[%207, %c0_62] : memref<64x512xf32, #tpu.memory_space<vmem>>, vector<8x512xf32>
    %c0_63 = arith.constant 0 : index
    %c0_64 = arith.constant 0 : index
    %209 = vector.load %arg3[%c0_63, %c0_64] : memref<128x512xf32, #tpu.memory_space<vmem>>, vector<128x512xf32>
    %cst_65 = arith.constant dense<0.000000e+00> : vector<8x512xf32>
    %210 = tpu.matmul %204, %209, %cst_65 {dimension_numbers = #tpu.dot_dimension_numbers<[1], [0], [0], [1], [0, 0, 1, 1], [], []>} : vector<8x128xf32>, vector<128x512xf32>, vector<8x512xf32> -> vector<8x512xf32>
    %211 = arith.addf %208, %210 : vector<8x512xf32>
    %212 = vector.extract_strided_slice %211 {offsets = [0, 0], sizes = [8, 128], strides = [1, 1]} : vector<8x512xf32> to vector<8x128xf32>
    %213 = arith.negf %212 : vector<8x128xf32>
    %214 = math.exp %213 : vector<8x128xf32>
    %cst_66 = arith.constant 1.000000e+00 : f32
    %215 = vector.broadcast %cst_66 : f32 to vector<8x128xf32>
    %216 = arith.addf %215, %214 : vector<8x128xf32>
    %217 = arith.divf %215, %216 : vector<8x128xf32>
    %218 = vector.extract_strided_slice %211 {offsets = [0, 128], sizes = [8, 128], strides = [1, 1]} : vector<8x512xf32> to vector<8x128xf32>
    %219 = arith.negf %218 : vector<8x128xf32>
    %220 = math.exp %219 : vector<8x128xf32>
    %cst_67 = arith.constant 1.000000e+00 : f32
    %221 = vector.broadcast %cst_67 : f32 to vector<8x128xf32>
    %222 = arith.addf %221, %220 : vector<8x128xf32>
    %223 = arith.divf %221, %222 : vector<8x128xf32>
    %224 = vector.extract_strided_slice %211 {offsets = [0, 256], sizes = [8, 128], strides = [1, 1]} : vector<8x512xf32> to vector<8x128xf32>
    %225 = math.tanh %224 : vector<8x128xf32>
    %226 = vector.extract_strided_slice %211 {offsets = [0, 384], sizes = [8, 128], strides = [1, 1]} : vector<8x512xf32> to vector<8x128xf32>
    %227 = arith.negf %226 : vector<8x128xf32>
    %228 = math.exp %227 : vector<8x128xf32>
    %cst_68 = arith.constant 1.000000e+00 : f32
    %229 = vector.broadcast %cst_68 : f32 to vector<8x128xf32>
    %230 = arith.addf %229, %228 : vector<8x128xf32>
    %231 = arith.divf %229, %230 : vector<8x128xf32>
    %232 = arith.mulf %223, %202 : vector<8x128xf32>
    %233 = arith.mulf %217, %225 : vector<8x128xf32>
    %234 = arith.addf %232, %233 : vector<8x128xf32>
    %235 = math.tanh %234 : vector<8x128xf32>
    %236 = arith.mulf %231, %235 : vector<8x128xf32>
    %c7_i32 = arith.constant 7 : i32
    %c8_i32_69 = arith.constant 8 : i32
    %237 = arith.muli %c7_i32, %c8_i32_69 : i32
    %238 = tpu.assume_multiple %237, 8 : i32
    %239 = arith.index_cast %238 : i32 to index
    %c0_70 = arith.constant 0 : index
    %240 = vector.load %arg6[%239, %c0_70] : memref<64x512xf32, #tpu.memory_space<vmem>>, vector<8x512xf32>
    %c0_71 = arith.constant 0 : index
    %c0_72 = arith.constant 0 : index
    %241 = vector.load %arg3[%c0_71, %c0_72] : memref<128x512xf32, #tpu.memory_space<vmem>>, vector<128x512xf32>
    %cst_73 = arith.constant dense<0.000000e+00> : vector<8x512xf32>
    %242 = tpu.matmul %236, %241, %cst_73 {dimension_numbers = #tpu.dot_dimension_numbers<[1], [0], [0], [1], [0, 0, 1, 1], [], []>} : vector<8x128xf32>, vector<128x512xf32>, vector<8x512xf32> -> vector<8x512xf32>
    %243 = arith.addf %240, %242 : vector<8x512xf32>
    %244 = vector.extract_strided_slice %243 {offsets = [0, 0], sizes = [8, 128], strides = [1, 1]} : vector<8x512xf32> to vector<8x128xf32>
    %245 = arith.negf %244 : vector<8x128xf32>
    %246 = math.exp %245 : vector<8x128xf32>
    %cst_74 = arith.constant 1.000000e+00 : f32
    %247 = vector.broadcast %cst_74 : f32 to vector<8x128xf32>
    %248 = arith.addf %247, %246 : vector<8x128xf32>
    %249 = arith.divf %247, %248 : vector<8x128xf32>
    %250 = vector.extract_strided_slice %243 {offsets = [0, 128], sizes = [8, 128], strides = [1, 1]} : vector<8x512xf32> to vector<8x128xf32>
    %251 = arith.negf %250 : vector<8x128xf32>
    %252 = math.exp %251 : vector<8x128xf32>
    %cst_75 = arith.constant 1.000000e+00 : f32
    %253 = vector.broadcast %cst_75 : f32 to vector<8x128xf32>
    %254 = arith.addf %253, %252 : vector<8x128xf32>
    %255 = arith.divf %253, %254 : vector<8x128xf32>
    %256 = vector.extract_strided_slice %243 {offsets = [0, 256], sizes = [8, 128], strides = [1, 1]} : vector<8x512xf32> to vector<8x128xf32>
    %257 = math.tanh %256 : vector<8x128xf32>
    %258 = vector.extract_strided_slice %243 {offsets = [0, 384], sizes = [8, 128], strides = [1, 1]} : vector<8x512xf32> to vector<8x128xf32>
    %259 = arith.negf %258 : vector<8x128xf32>
    %260 = math.exp %259 : vector<8x128xf32>
    %cst_76 = arith.constant 1.000000e+00 : f32
    %261 = vector.broadcast %cst_76 : f32 to vector<8x128xf32>
    %262 = arith.addf %261, %260 : vector<8x128xf32>
    %263 = arith.divf %261, %262 : vector<8x128xf32>
    %264 = arith.mulf %255, %234 : vector<8x128xf32>
    %265 = arith.mulf %249, %257 : vector<8x128xf32>
    %266 = arith.addf %264, %265 : vector<8x128xf32>
    %267 = math.tanh %266 : vector<8x128xf32>
    %268 = arith.mulf %263, %267 : vector<8x128xf32>
    %c8_i32_77 = arith.constant 8 : i32
    %c0_78 = arith.constant 0 : index
    %c0_79 = arith.constant 0 : index
    %269 = vector.load %arg7[%c0_78, %c0_79] : memref<8x128xf32, #tpu.memory_space<vmem>>, vector<8x128xf32>
    tpu.vector_store %arg7[%c0_78, %c0_79], %268 {strides = array<i32>} : memref<8x128xf32, #tpu.memory_space<vmem>>, vector<8x128xf32>,
    %c0_80 = arith.constant 0 : index
    %c0_81 = arith.constant 0 : index
    %270 = vector.load %arg8[%c0_80, %c0_81] : memref<8x128xf32, #tpu.memory_space<vmem>>, vector<8x128xf32>
    tpu.vector_store %arg8[%c0_80, %c0_81], %266 {strides = array<i32>} : memref<8x128xf32, #tpu.memory_space<vmem>>, vector<8x128xf32>,
    %c0_i32_82 = arith.constant 0 : i32
    %271 = arith.cmpi eq, %arg0, %c0_i32_82 : i32
    %272 = arith.extui %271 : i1 to i32
    %c0_i32_83 = arith.constant 0 : i32
    %273 = arith.cmpi ne, %272, %c0_i32_83 : i32
    scf.if %273 {
      %c0_84 = arith.constant 0 : index
      %c0_85 = arith.constant 0 : index
      %274 = vector.load %arg5[%c0_84, %c0_85] : memref<8x128xf32, #tpu.memory_space<vmem>>, vector<8x128xf32>
      tpu.vector_store %arg5[%c0_84, %c0_85], %268 {strides = array<i32>} : memref<8x128xf32, #tpu.memory_space<vmem>>, vector<8x128xf32>,
    } else {
    }
    return
  }
  func.func @transform_0(%arg0: i32) -> (i32, i32, i32) {
    %c0_i32 = arith.constant 0 : i32
    %c0_i32_0 = arith.constant 0 : i32
    %c0_i32_1 = arith.constant 0 : i32
    return %arg0, %c0_i32, %c0_i32_0 : i32, i32, i32
  }
  func.func @transform_1(%arg0: i32) -> (i32, i32) {
    %c0_i32 = arith.constant 0 : i32
    %c0_i32_0 = arith.constant 0 : i32
    %c0_i32_1 = arith.constant 0 : i32
    return %c0_i32, %c0_i32_0 : i32, i32
  }
  func.func @transform_2(%arg0: i32) -> (i32, i32) {
    %c0_i32 = arith.constant 0 : i32
    %c0_i32_0 = arith.constant 0 : i32
    %c0_i32_1 = arith.constant 0 : i32
    return %c0_i32, %c0_i32_0 : i32, i32
  }
  func.func @transform_3(%arg0: i32) -> (i32, i32) {
    %c0_i32 = arith.constant 0 : i32
    %c0_i32_0 = arith.constant 0 : i32
    %c0_i32_1 = arith.constant 0 : i32
    return %c0_i32, %c0_i32_0 : i32, i32
  }
  func.func @transform_4(%arg0: i32) -> (i32, i32) {
    %c0_i32 = arith.constant 0 : i32
    %c0_i32_0 = arith.constant 0 : i32
    %c0_i32_1 = arith.constant 0 : i32
    return %c0_i32, %c0_i32_0 : i32, i32
  }
}

</mosaic_0001>

<llo_original>
// kernel: lstm_model_forward.1
$region0: #{lstm_model_forward.1}
  #allocation0 [shape = 'u32[]', space=smem, size = 0x4, offset = 0x4, fixed_abs, tag = 'smem constant byte address 0x4 - core index']
  #allocation1 [shape = 'u32[72,128]{1,0:T(1,128)}', space=vmem, size = 0x9000, scoped, tag = 'internal scratch']
  #allocation2 [shape = 'f32[64,512]{1,0:T(8,128)}', space=vmem, size = 0x20000, scoped, tag = 'scratch operand']
  #allocation3 [shape = 'f32[8,128]{1,0:T(8,128)}', space=vmem, size = 0x1000, scoped, tag = 'scratch operand']
  #allocation4 [shape = 'f32[8,128]{1,0:T(8,128)}', space=vmem, size = 0x1000, scoped, tag = 'scratch operand']
  %s0 = inlined_call_operand.vmem [shape: f32[1,64,8], index: 0, kind: input, shape index: {}]
  %s1 = inlined_call_operand.vmem [shape: f32[8,512], index: 1, kind: input, shape index: {}]
  %s2 = inlined_call_operand.vmem [shape: f32[128,512], index: 2, kind: input, shape index: {}]
  %s3 = inlined_call_operand.vmem [shape: f32[1,512], index: 3, kind: input, shape index: {}]
  %s4 = inlined_call_operand.vmem [shape: f32[8,128], index: 4, kind: output, shape index: {}]
  %s5 = sld [smem:[#allocation0]]
  $region34: #{lstm_model_forward.1} parent=0
    _
  %s7 = ssub.s32 1, %s5
  %s8 = scalar_select 0, %s7, %s5
  // Predicated region
  $region2: #{lstm_model_forward.1} parent=0 // pred_check
    _
  $region3: #{lstm_model_forward.1} parent=0 // pred_check_branch
    %10 = sbr.rel (0) target = $region5
  $region4: #{lstm_model_forward.1} parent=0 // pred_region
    _
  $region5: #{lstm_model_forward.1} parent=0 // pred_fallthru
    _
  // Predicated region
  $region6: #{lstm_model_forward.1} parent=0 // pred_check
    _
  $region7: #{lstm_model_forward.1} parent=0 // pred_check_branch
    %12 = sbr.rel (0) target = $region9
  $region8: #{lstm_model_forward.1} parent=0 // pred_region
    _
  $region9: #{lstm_model_forward.1} parent=0 // pred_fallthru
    _
  // Predicated region
  $region10: #{lstm_model_forward.1} parent=0 // pred_check
    _
  $region11: #{lstm_model_forward.1} parent=0 // pred_check_branch
    %14 = sbr.rel (0) target = $region13
  $region12: #{lstm_model_forward.1} parent=0 // pred_region
    _
  $region13: #{lstm_model_forward.1} parent=0 // pred_fallthru
    _
  // Predicated region
  $region14: #{lstm_model_forward.1} parent=0 // pred_check
    _
  $region15: #{lstm_model_forward.1} parent=0 // pred_check_branch
    %16 = sbr.rel (0) target = $region17
  $region16: #{lstm_model_forward.1} parent=0 // pred_region
    _
  $region17: #{lstm_model_forward.1} parent=0 // pred_fallthru
    _
  %p17 = scmp.eq.s32.totalorder 0, 0
  // Predicated region
  $region18: #{lstm_model_forward.1} parent=0 // pred_check
    %p18 = pneg %p17
  $region19: #{lstm_model_forward.1} parent=0 // pred_check_branch
    %20 = sbr.rel (%p18) target = $region21
  $region20: #{lstm_model_forward.1} parent=0 // pred_region
    %21 = vst [vmem:[#allocation3] sm:$0xff] 0.0
    %22 = vst [vmem:[#allocation4] sm:$0xff] 0.0
  $region21: #{lstm_model_forward.1} parent=0 // pred_fallthru
    _
  %v23 = vld [vmem:[%s0] sm:$0xff]
  %v24 = vld [vmem:[%s0 + $0x8] sm:$0xff]
  %v25 = vld [vmem:[%s0 + $0x10] sm:$0xff]
  %v26 = vld [vmem:[%s0 + $0x18] sm:$0xff]
  %v27 = vld [vmem:[%s0 + $0x20] sm:$0xff]
  %v28 = vld [vmem:[%s0 + $0x28] sm:$0xff]
  %v29 = vld [vmem:[%s0 + $0x30] sm:$0xff]
  %v30 = vld [vmem:[%s0 + $0x38] sm:$0xff]
  %v31 = vld [vmem:[%s1] sm:$0xff]
  %v32 = vld [vmem:[%s1 + $0x8] sm:$0xff]
  %v33 = vld [vmem:[%s1 + $0x10] sm:$0xff]
  %v34 = vld [vmem:[%s1 + $0x18] sm:$0xff]
  %v35 = vld [vmem:[%s3] sm:$0xf]
  %v37 = vperm.slane %v35, 0
  %v38 = vperm.slane %v35, 1
  %v39 = vperm.slane %v35, 2
  %v40 = vperm.slane %v35, 3
  %vm45 = vcmask 64512
  %v47 = vsel %vm45, %v23, 0
  %v50 = vsel %vm45, %v24, 0
  %v53 = vsel %vm45, %v25, 0
  %v56 = vsel %vm45, %v26, 0
  %v59 = vsel %vm45, %v27, 0
  %v62 = vsel %vm45, %v28, 0
  %v65 = vsel %vm45, %v29, 0
  %v68 = vsel %vm45, %v30, 0
  %70 = vmatpush.msra.mxu0 0.0
  %71 = vmatpush.msra.mxu0 0.0
  %72 = vmatpush.msra.mxu0 0.0
  %73 = vmatpush.msra.mxu0 0.0
  %74 = vmatpush.msra.mxu0 0.0
  %75 = vmatpush.msra.mxu0 0.0
  %76 = vmatpush.msra.mxu0 0.0
  %77 = vmatpush.msra.mxu0 0.0
  %78 = vmatpush.msra.mxu0 0.0
  %79 = vmatpush.msra.mxu0 0.0
  %80 = vmatpush.msra.mxu0 0.0
  %81 = vmatpush.msra.mxu0 0.0
  %82 = vmatpush.msra.mxu0 0.0
  %83 = vmatpush.msra.mxu0 0.0
  %84 = vmatpush.msra.mxu0 0.0
  %85 = vmatpush.msra.mxu0 %v31
  %86 = vmatmul.f32.gmra.mxu0 %v47
  %v87 = vpop.f32.mrf.mxu0
  %v88 = vadd.f32 %v37, %v87
  %89 = vmatmul.f32.gmra.mxu0 %v50
  %v90 = vpop.f32.mrf.mxu0
  %v91 = vadd.f32 %v37, %v90
  %92 = vmatmul.f32.gmra.mxu0 %v53
  %v93 = vpop.f32.mrf.mxu0
  %v94 = vadd.f32 %v37, %v93
  %95 = vmatmul.f32.gmra.mxu0 %v56
  %v96 = vpop.f32.mrf.mxu0
  %v97 = vadd.f32 %v37, %v96
  %98 = vmatmul.f32.gmra.mxu0 %v59
  %v99 = vpop.f32.mrf.mxu0
  %v100 = vadd.f32 %v37, %v99
  %101 = vmatmul.f32.gmra.mxu0 %v62
  %v102 = vpop.f32.mrf.mxu0
  %v103 = vadd.f32 %v37, %v102
  %104 = vmatmul.f32.gmra.mxu0 %v65
  %v105 = vpop.f32.mrf.mxu0
  %v106 = vadd.f32 %v37, %v105
  %107 = vmatmul.f32.gmra.mxu0 %v68
  %v108 = vpop.f32.mrf.mxu0
  %v109 = vadd.f32 %v37, %v108
  %110 = vdwg.mxu0
  %111 = vmatpush.msra.mxu0 0.0
  %112 = vmatpush.msra.mxu0 0.0
  %113 = vmatpush.msra.mxu0 0.0
  %114 = vmatpush.msra.mxu0 0.0
  %115 = vmatpush.msra.mxu0 0.0
  %116 = vmatpush.msra.mxu0 0.0
  %117 = vmatpush.msra.mxu0 0.0
  %118 = vmatpush.msra.mxu0 0.0
  %119 = vmatpush.msra.mxu0 0.0
  %120 = vmatpush.msra.mxu0 0.0
  %121 = vmatpush.msra.mxu0 0.0
  %122 = vmatpush.msra.mxu0 0.0
  %123 = vmatpush.msra.mxu0 0.0
  %124 = vmatpush.msra.mxu0 0.0
  %125 = vmatpush.msra.mxu0 0.0
  %126 = vmatpush.msra.mxu0 %v32
  %127 = vmatmul.f32.gmra.mxu0 %v47
  %v128 = vpop.f32.mrf.mxu0
  %v129 = vadd.f32 %v38, %v128
  %130 = vmatmul.f32.gmra.mxu0 %v50
  %v131 = vpop.f32.mrf.mxu0
  %v132 = vadd.f32 %v38, %v131
  %133 = vmatmul.f32.gmra.mxu0 %v53
  %v134 = vpop.f32.mrf.mxu0
  %v135 = vadd.f32 %v38, %v134
  %136 = vmatmul.f32.gmra.mxu0 %v56
  %v137 = vpop.f32.mrf.mxu0
  %v138 = vadd.f32 %v38, %v137
  %139 = vmatmul.f32.gmra.mxu0 %v59
  %v140 = vpop.f32.mrf.mxu0
  %v141 = vadd.f32 %v38, %v140
  %142 = vmatmul.f32.gmra.mxu0 %v62
  %v143 = vpop.f32.mrf.mxu0
  %v144 = vadd.f32 %v38, %v143
  %145 = vmatmul.f32.gmra.mxu0 %v65
  %v146 = vpop.f32.mrf.mxu0
  %v147 = vadd.f32 %v38, %v146
  %148 = vmatmul.f32.gmra.mxu0 %v68
  %v149 = vpop.f32.mrf.mxu0
  %v150 = vadd.f32 %v38, %v149
  %151 = vdwg.mxu0
  %152 = vmatpush.msra.mxu0 0.0
  %153 = vmatpush.msra.mxu0 0.0
  %154 = vmatpush.msra.mxu0 0.0
  %155 = vmatpush.msra.mxu0 0.0
  %156 = vmatpush.msra.mxu0 0.0
  %157 = vmatpush.msra.mxu0 0.0
  %158 = vmatpush.msra.mxu0 0.0
  %159 = vmatpush.msra.mxu0 0.0
  %160 = vmatpush.msra.mxu0 0.0
  %161 = vmatpush.msra.mxu0 0.0
  %162 = vmatpush.msra.mxu0 0.0
  %163 = vmatpush.msra.mxu0 0.0
  %164 = vmatpush.msra.mxu0 0.0
  %165 = vmatpush.msra.mxu0 0.0
  %166 = vmatpush.msra.mxu0 0.0
  %167 = vmatpush.msra.mxu0 %v33
  %168 = vmatmul.f32.gmra.mxu0 %v47
  %v169 = vpop.f32.mrf.mxu0
  %v170 = vadd.f32 %v39, %v169
  %171 = vmatmul.f32.gmra.mxu0 %v50
  %v172 = vpop.f32.mrf.mxu0
  %v173 = vadd.f32 %v39, %v172
  %174 = vmatmul.f32.gmra.mxu0 %v53
  %v175 = vpop.f32.mrf.mxu0
  %v176 = vadd.f32 %v39, %v175
  %177 = vmatmul.f32.gmra.mxu0 %v56
  %v178 = vpop.f32.mrf.mxu0
  %v179 = vadd.f32 %v39, %v178
  %180 = vmatmul.f32.gmra.mxu0 %v59
  %v181 = vpop.f32.mrf.mxu0
  %v182 = vadd.f32 %v39, %v181
  %183 = vmatmul.f32.gmra.mxu0 %v62
  %v184 = vpop.f32.mrf.mxu0
  %v185 = vadd.f32 %v39, %v184
  %186 = vmatmul.f32.gmra.mxu0 %v65
  %v187 = vpop.f32.mrf.mxu0
  %v188 = vadd.f32 %v39, %v187
  %189 = vmatmul.f32.gmra.mxu0 %v68
  %v190 = vpop.f32.mrf.mxu0
  %v191 = vadd.f32 %v39, %v190
  %192 = vdwg.mxu0
  %193 = vmatpush.msra.mxu0 0.0
  %194 = vmatpush.msra.mxu0 0.0
  %195 = vmatpush.msra.mxu0 0.0
  %196 = vmatpush.msra.mxu0 0.0
  %197 = vmatpush.msra.mxu0 0.0
  %198 = vmatpush.msra.mxu0 0.0
  %199 = vmatpush.msra.mxu0 0.0
  %200 = vmatpush.msra.mxu0 0.0
  %201 = vmatpush.msra.mxu0 0.0
  %202 = vmatpush.msra.mxu0 0.0
  %203 = vmatpush.msra.mxu0 0.0
  %204 = vmatpush.msra.mxu0 0.0
  %205 = vmatpush.msra.mxu0 0.0
  %206 = vmatpush.msra.mxu0 0.0
  %207 = vmatpush.msra.mxu0 0.0
  %208 = vmatpush.msra.mxu0 %v34
  %209 = vmatmul.f32.gmra.mxu0 %v47
  %v210 = vpop.f32.mrf.mxu0
  %v211 = vadd.f32 %v40, %v210
  %212 = vmatmul.f32.gmra.mxu0 %v50
  %v213 = vpop.f32.mrf.mxu0
  %v214 = vadd.f32 %v40, %v213
  %215 = vmatmul.f32.gmra.mxu0 %v53
  %v216 = vpop.f32.mrf.mxu0
  %v217 = vadd.f32 %v40, %v216
  %218 = vmatmul.f32.gmra.mxu0 %v56
  %v219 = vpop.f32.mrf.mxu0
  %v220 = vadd.f32 %v40, %v219
  %221 = vmatmul.f32.gmra.mxu0 %v59
  %v222 = vpop.f32.mrf.mxu0
  %v223 = vadd.f32 %v40, %v222
  %224 = vmatmul.f32.gmra.mxu0 %v62
  %v225 = vpop.f32.mrf.mxu0
  %v226 = vadd.f32 %v40, %v225
  %227 = vmatmul.f32.gmra.mxu0 %v65
  %v228 = vpop.f32.mrf.mxu0
  %v229 = vadd.f32 %v40, %v228
  %230 = vmatmul.f32.gmra.mxu0 %v68
  %v231 = vpop.f32.mrf.mxu0
  %v232 = vadd.f32 %v40, %v231
  %233 = vdwg.mxu0
  %234 = vst [vmem:[#allocation2] sm:$0xff] %v88
  %235 = vst [vmem:[#allocation2 + $0x8] sm:$0xff] %v129
  %236 = vst [vmem:[#allocation2 + $0x10] sm:$0xff] %v170
  %237 = vst [vmem:[#allocation2 + $0x18] sm:$0xff] %v211
  %238 = vst [vmem:[#allocation2 + $0x20] sm:$0xff] %v91
  %239 = vst [vmem:[#allocation2 + $0x28] sm:$0xff] %v132
  %240 = vst [vmem:[#allocation2 + $0x30] sm:$0xff] %v173
  %241 = vst [vmem:[#allocation2 + $0x38] sm:$0xff] %v214
  %242 = vst [vmem:[#allocation2 + $0x40] sm:$0xff] %v94
  %243 = vst [vmem:[#allocation2 + $0x48] sm:$0xff] %v135
  %244 = vst [vmem:[#allocation2 + $0x50] sm:$0xff] %v176
  %245 = vst [vmem:[#allocation2 + $0x58] sm:$0xff] %v217
  %246 = vst [vmem:[#allocation2 + $0x60] sm:$0xff] %v97
  %247 = vst [vmem:[#allocation2 + $0x68] sm:$0xff] %v138
  %248 = vst [vmem:[#allocation2 + $0x70] sm:$0xff] %v179
  %249 = vst [vmem:[#allocation2 + $0x78] sm:$0xff] %v220
  %250 = vst [vmem:[#allocation2 + $0x80] sm:$0xff] %v100
  %251 = vst [vmem:[#allocation2 + $0x88] sm:$0xff] %v141
  %252 = vst [vmem:[#allocation2 + $0x90] sm:$0xff] %v182
  %253 = vst [vmem:[#allocation2 + $0x98] sm:$0xff] %v223
  %254 = vst [vmem:[#allocation2 + $0xa0] sm:$0xff] %v103
  %255 = vst [vmem:[#allocation2 + $0xa8] sm:$0xff] %v144
  %256 = vst [vmem:[#allocation2 + $0xb0] sm:$0xff] %v185
  %257 = vst [vmem:[#allocation2 + $0xb8] sm:$0xff] %v226
  %258 = vst [vmem:[#allocation2 + $0xc0] sm:$0xff] %v106
  %259 = vst [vmem:[#allocation2 + $0xc8] sm:$0xff] %v147
  %260 = vst [vmem:[#allocation2 + $0xd0] sm:$0xff] %v188
  %261 = vst [vmem:[#allocation2 + $0xd8] sm:$0xff] %v229
  %262 = vst [vmem:[#allocation2 + $0xe0] sm:$0xff] %v109
  %263 = vst [vmem:[#allocation2 + $0xe8] sm:$0xff] %v150
  %264 = vst [vmem:[#allocation2 + $0xf0] sm:$0xff] %v191
  %265 = vst [vmem:[#allocation2 + $0xf8] sm:$0xff] %v232
  %v266 = vld [vmem:[#allocation3] sm:$0xff]
  %v267 = vld [vmem:[#allocation4] sm:$0xff]
  %s268 = smul.u32 0, 4
  %s269 = smul.addr %s268, 8
  %s270 = scalar_lea.vmem [#allocation2], %s269
  %v271 = vld [vmem:[%s270] sm:$0xff]
  %v272 = vld [vmem:[%s270 + $0x8] sm:$0xff]
  %v273 = vld [vmem:[%s270 + $0x10] sm:$0xff]
  %v274 = vld [vmem:[%s270 + $0x18] sm:$0xff]
  %v275 = vld [vmem:[%s2] sm:$0xff]
  %v276 = vld [vmem:[%s2 + $0x8] sm:$0xff]
  %v277 = vld [vmem:[%s2 + $0x10] sm:$0xff]
  %v278 = vld [vmem:[%s2 + $0x18] sm:$0xff]
  %v279 = vld [vmem:[%s2 + $0x20] sm:$0xff]
  %v280 = vld [vmem:[%s2 + $0x28] sm:$0xff]
  %v281 = vld [vmem:[%s2 + $0x30] sm:$0xff]
  %v282 = vld [vmem:[%s2 + $0x38] sm:$0xff]
  %v283 = vld [vmem:[%s2 + $0x40] sm:$0xff]
  %v284 = vld [vmem:[%s2 + $0x48] sm:$0xff]
  %v285 = vld [vmem:[%s2 + $0x50] sm:$0xff]
  %v286 = vld [vmem:[%s2 + $0x58] sm:$0xff]
  %v287 = vld [vmem:[%s2 + $0x60] sm:$0xff]
  %v288 = vld [vmem:[%s2 + $0x68] sm:$0xff]
  %v289 = vld [vmem:[%s2 + $0x70] sm:$0xff]
  %v290 = vld [vmem:[%s2 + $0x78] sm:$0xff]
  %v291 = vld [vmem:[%s2 + $0x80] sm:$0xff]
  %v292 = vld [vmem:[%s2 + $0x88] sm:$0xff]
  %v293 = vld [vmem:[%s2 + $0x90] sm:$0xff]
  %v294 = vld [vmem:[%s2 + $0x98] sm:$0xff]
  %v295 = vld [vmem:[%s2 + $0xa0] sm:$0xff]
  %v296 = vld [vmem:[%s2 + $0xa8] sm:$0xff]
  %v297 = vld [vmem:[%s2 + $0xb0] sm:$0xff]
  %v298 = vld [vmem:[%s2 + $0xb8] sm:$0xff]
  %v299 = vld [vmem:[%s2 + $0xc0] sm:$0xff]
  %v300 = vld [vmem:[%s2 + $0xc8] sm:$0xff]
  %v301 = vld [vmem:[%s2 + $0xd0] sm:$0xff]
  %v302 = vld [vmem:[%s2 + $0xd8] sm:$0xff]
  %v303 = vld [vmem:[%s2 + $0xe0] sm:$0xff]
  %v304 = vld [vmem:[%s2 + $0xe8] sm:$0xff]
  %v305 = vld [vmem:[%s2 + $0xf0] sm:$0xff]
  %v306 = vld [vmem:[%s2 + $0xf8] sm:$0xff]
  %v307 = vld [vmem:[%s2 + $0x100] sm:$0xff]
  %v308 = vld [vmem:[%s2 + $0x108] sm:$0xff]
  %v309 = vld [vmem:[%s2 + $0x110] sm:$0xff]
  %v310 = vld [vmem:[%s2 + $0x118] sm:$0xff]
  %v311 = vld [vmem:[%s2 + $0x120] sm:$0xff]
  %v312 = vld [vmem:[%s2 + $0x128] sm:$0xff]
  %v313 = vld [vmem:[%s2 + $0x130] sm:$0xff]
  %v314 = vld [vmem:[%s2 + $0x138] sm:$0xff]
  %v315 = vld [vmem:[%s2 + $0x140] sm:$0xff]
  %v316 = vld [vmem:[%s2 + $0x148] sm:$0xff]
  %v317 = vld [vmem:[%s2 + $0x150] sm:$0xff]
  %v318 = vld [vmem:[%s2 + $0x158] sm:$0xff]
  %v319 = vld [vmem:[%s2 + $0x160] sm:$0xff]
  %v320 = vld [vmem:[%s2 + $0x168] sm:$0xff]
  %v321 = vld [vmem:[%s2 + $0x170] sm:$0xff]
  %v322 = vld [vmem:[%s2 + $0x178] sm:$0xff]
  %v323 = vld [vmem:[%s2 + $0x180] sm:$0xff]
  %v324 = vld [vmem:[%s2 + $0x188] sm:$0xff]
  %v325 = vld [vmem:[%s2 + $0x190] sm:$0xff]
  %v326 = vld [vmem:[%s2 + $0x198] sm:$0xff]
  %v327 = vld [vmem:[%s2 + $0x1a0] sm:$0xff]
  %v328 = vld [vmem:[%s2 + $0x1a8] sm:$0xff]
  %v329 = vld [vmem:[%s2 + $0x1b0] sm:$0xff]
  %v330 = vld [vmem:[%s2 + $0x1b8] sm:$0xff]
  %v331 = vld [vmem:[%s2 + $0x1c0] sm:$0xff]
  %v332 = vld [vmem:[%s2 + $0x1c8] sm:$0xff]
  %v333 = vld [vmem:[%s2 + $0x1d0] sm:$0xff]
  %v334 = vld [vmem:[%s2 + $0x1d8] sm:$0xff]
  %v335 = vld [vmem:[%s2 + $0x1e0] sm:$0xff]
  %v336 = vld [vmem:[%s2 + $0x1e8] sm:$0xff]
  %v337 = vld [vmem:[%s2 + $0x1f0] sm:$0xff]
  %v338 = vld [vmem:[%s2 + $0x1f8] sm:$0xff]
  %339 = vmatpush.msra.mxu0 %v335
  %340 = vmatpush.msra.mxu0 %v331
  %341 = vmatpush.msra.mxu0 %v327
  %342 = vmatpush.msra.mxu0 %v323
  %343 = vmatpush.msra.mxu0 %v319
  %344 = vmatpush.msra.mxu0 %v315
  %345 = vmatpush.msra.mxu0 %v311
  %346 = vmatpush.msra.mxu0 %v307
  %347 = vmatpush.msra.mxu0 %v303
  %348 = vmatpush.msra.mxu0 %v299
  %349 = vmatpush.msra.mxu0 %v295
  %350 = vmatpush.msra.mxu0 %v291
  %351 = vmatpush.msra.mxu0 %v287
  %352 = vmatpush.msra.mxu0 %v283
  %353 = vmatpush.msra.mxu0 %v279
  %354 = vmatpush.msra.mxu0 %v275
  %355 = vmatmul.f32.gmra.mxu0 %v266
  %v356 = vpop.f32.mrf.mxu0
  %v357 = vadd.f32 0.0, %v356
  %358 = vdwg.mxu0
  %359 = vmatpush.msra.mxu0 %v336
  %360 = vmatpush.msra.mxu0 %v332
  %361 = vmatpush.msra.mxu0 %v328
  %362 = vmatpush.msra.mxu0 %v324
  %363 = vmatpush.msra.mxu0 %v320
  %364 = vmatpush.msra.mxu0 %v316
  %365 = vmatpush.msra.mxu0 %v312
  %366 = vmatpush.msra.mxu0 %v308
  %367 = vmatpush.msra.mxu0 %v304
  %368 = vmatpush.msra.mxu0 %v300
  %369 = vmatpush.msra.mxu0 %v296
  %370 = vmatpush.msra.mxu0 %v292
  %371 = vmatpush.msra.mxu0 %v288
  %372 = vmatpush.msra.mxu0 %v284
  %373 = vmatpush.msra.mxu0 %v280
  %374 = vmatpush.msra.mxu0 %v276
  %375 = vmatmul.f32.gmra.mxu0 %v266
  %v376 = vpop.f32.mrf.mxu0
  %v377 = vadd.f32 0.0, %v376
  %378 = vdwg.mxu0
  %379 = vmatpush.msra.mxu0 %v337
  %380 = vmatpush.msra.mxu0 %v333
  %381 = vmatpush.msra.mxu0 %v329
  %382 = vmatpush.msra.mxu0 %v325
  %383 = vmatpush.msra.mxu0 %v321
  %384 = vmatpush.msra.mxu0 %v317
  %385 = vmatpush.msra.mxu0 %v313
  %386 = vmatpush.msra.mxu0 %v309
  %387 = vmatpush.msra.mxu0 %v305
  %388 = vmatpush.msra.mxu0 %v301
  %389 = vmatpush.msra.mxu0 %v297
  %390 = vmatpush.msra.mxu0 %v293
  %391 = vmatpush.msra.mxu0 %v289
  %392 = vmatpush.msra.mxu0 %v285
  %393 = vmatpush.msra.mxu0 %v281
  %394 = vmatpush.msra.mxu0 %v277
  %395 = vmatmul.f32.gmra.mxu0 %v266
  %v396 = vpop.f32.mrf.mxu0
  %v397 = vadd.f32 0.0, %v396
  %398 = vdwg.mxu0
  %399 = vmatpush.msra.mxu0 %v338
  %400 = vmatpush.msra.mxu0 %v334
  %401 = vmatpush.msra.mxu0 %v330
  %402 = vmatpush.msra.mxu0 %v326
  %403 = vmatpush.msra.mxu0 %v322
  %404 = vmatpush.msra.mxu0 %v318
  %405 = vmatpush.msra.mxu0 %v314
  %406 = vmatpush.msra.mxu0 %v310
  %407 = vmatpush.msra.mxu0 %v306
  %408 = vmatpush.msra.mxu0 %v302
  %409 = vmatpush.msra.mxu0 %v298
  %410 = vmatpush.msra.mxu0 %v294
  %411 = vmatpush.msra.mxu0 %v290
  %412 = vmatpush.msra.mxu0 %v286
  %413 = vmatpush.msra.mxu0 %v282
  %414 = vmatpush.msra.mxu0 %v278
  %415 = vmatmul.f32.gmra.mxu0 %v266
  %v416 = vpop.f32.mrf.mxu0
  %v417 = vadd.f32 0.0, %v416
  %418 = vdwg.mxu0
  %v419 = vadd.f32 %v271, %v357
  %v420 = vadd.f32 %v272, %v377
  %v421 = vadd.f32 %v273, %v397
  %v422 = vadd.f32 %v274, %v417
  %v423 = vxor.u32 %v419, 2147483648
  %v424 = vmul.f32 %v423, 1.442695
  %v425 = vpow.pop %v424
  %v426 = vadd.f32 %v425, 1.0
  %v427 = vrcp.pop %v426
  %v428 = vmul.f32 %v426, %v427
  %v429 = vsub.f32 1.0, %v428
  %v430 = vmul.f32 %v427, %v429
  %v431 = vadd.f32 %v427, %v430
  %vm432 = vweird.f32 %v426
  %vm433 = vweird.f32 %v427
  %vm434 = vmor %vm432, %vm433
  %v435 = vsel %vm434, %v427, %v431
  %v436 = vand.u32 2147483647, %v426
  %vm437 = vcmp.eq.f32.partialorder %v436, 8.507059e+37
  %v438 = vand.u32 %v426, 2147483648
  %v439 = vor.u32 1.1754944e-38, %v438
  %v440 = vsel %vm437, %v439, %v435
  %v441 = vmul.f32 1.0, %v440
  %v442 = vxor.u32 %v420, 2147483648
  %v443 = vmul.f32 %v442, 1.442695
  %v444 = vpow.pop %v443
  %v445 = vadd.f32 %v444, 1.0
  %v446 = vrcp.pop %v445
  %v447 = vmul.f32 %v445, %v446
  %v448 = vsub.f32 1.0, %v447
  %v449 = vmul.f32 %v446, %v448
  %v450 = vadd.f32 %v446, %v449
  %vm451 = vweird.f32 %v445
  %vm452 = vweird.f32 %v446
  %vm453 = vmor %vm451, %vm452
  %v454 = vsel %vm453, %v446, %v450
  %v455 = vand.u32 2147483647, %v445
  %vm456 = vcmp.eq.f32.partialorder %v455, 8.507059e+37
  %v457 = vand.u32 %v445, 2147483648
  %v458 = vor.u32 1.1754944e-38, %v457
  %v459 = vsel %vm456, %v458, %v454
  %v460 = vmul.f32 1.0, %v459
  %v461 = vtanh.pop %v421
  %v462 = vxor.u32 %v422, 2147483648
  %v463 = vmul.f32 %v462, 1.442695
  %v464 = vpow.pop %v463
  %v465 = vadd.f32 %v464, 1.0
  %v466 = vrcp.pop %v465
  %v467 = vmul.f32 %v465, %v466
  %v468 = vsub.f32 1.0, %v467
  %v469 = vmul.f32 %v466, %v468
  %v470 = vadd.f32 %v466, %v469
  %vm471 = vweird.f32 %v465
  %vm472 = vweird.f32 %v466
  %vm473 = vmor %vm471, %vm472
  %v474 = vsel %vm473, %v466, %v470
  %v475 = vand.u32 2147483647, %v465
  %vm476 = vcmp.eq.f32.partialorder %v475, 8.507059e+37
  %v477 = vand.u32 %v465, 2147483648
  %v478 = vor.u32 1.1754944e-38, %v477
  %v479 = vsel %vm476, %v478, %v474
  %v480 = vmul.f32 1.0, %v479
  %v481 = vmul.f32 %v460, %v267
  %v482 = vmul.f32 %v441, %v461
  %v483 = vadd.f32 %v481, %v482
  %v484 = vtanh.pop %v483
  %v485 = vmul.f32 %v480, %v484
  %s486 = smul.u32 1, 4
  %s487 = smul.addr %s486, 8
  %s488 = scalar_lea.vmem [#allocation2], %s487
  %v489 = vld [vmem:[%s488] sm:$0xff]
  %v490 = vld [vmem:[%s488 + $0x8] sm:$0xff]
  %v491 = vld [vmem:[%s488 + $0x10] sm:$0xff]
  %v492 = vld [vmem:[%s488 + $0x18] sm:$0xff]
  %493 = vmatpush.msra.mxu0 %v335
  %494 = vmatpush.msra.mxu0 %v331
  %495 = vmatpush.msra.mxu0 %v327
  %496 = vmatpush.msra.mxu0 %v323
  %497 = vmatpush.msra.mxu0 %v319
  %498 = vmatpush.msra.mxu0 %v315
  %499 = vmatpush.msra.mxu0 %v311
  %500 = vmatpush.msra.mxu0 %v307
  %501 = vmatpush.msra.mxu0 %v303
  %502 = vmatpush.msra.mxu0 %v299
  %503 = vmatpush.msra.mxu0 %v295
  %504 = vmatpush.msra.mxu0 %v291
  %505 = vmatpush.msra.mxu0 %v287
  %506 = vmatpush.msra.mxu0 %v283
  %507 = vmatpush.msra.mxu0 %v279
  %508 = vmatpush.msra.mxu0 %v275
  %509 = vmatmul.f32.gmra.mxu0 %v485
  %v510 = vpop.f32.mrf.mxu0
  %v511 = vadd.f32 0.0, %v510
  %512 = vdwg.mxu0
  %513 = vmatpush.msra.mxu0 %v336
  %514 = vmatpush.msra.mxu0 %v332
  %515 = vmatpush.msra.mxu0 %v328
  %516 = vmatpush.msra.mxu0 %v324
  %517 = vmatpush.msra.mxu0 %v320
  %518 = vmatpush.msra.mxu0 %v316
  %519 = vmatpush.msra.mxu0 %v312
  %520 = vmatpush.msra.mxu0 %v308
  %521 = vmatpush.msra.mxu0 %v304
  %522 = vmatpush.msra.mxu0 %v300
  %523 = vmatpush.msra.mxu0 %v296
  %524 = vmatpush.msra.mxu0 %v292
  %525 = vmatpush.msra.mxu0 %v288
  %526 = vmatpush.msra.mxu0 %v284
  %527 = vmatpush.msra.mxu0 %v280
  %528 = vmatpush.msra.mxu0 %v276
  %529 = vmatmul.f32.gmra.mxu0 %v485
  %v530 = vpop.f32.mrf.mxu0
  %v531 = vadd.f32 0.0, %v530
  %532 = vdwg.mxu0
  %533 = vmatpush.msra.mxu0 %v337
  %534 = vmatpush.msra.mxu0 %v333
  %535 = vmatpush.msra.mxu0 %v329
  %536 = vmatpush.msra.mxu0 %v325
  %537 = vmatpush.msra.mxu0 %v321
  %538 = vmatpush.msra.mxu0 %v317
  %539 = vmatpush.msra.mxu0 %v313
  %540 = vmatpush.msra.mxu0 %v309
  %541 = vmatpush.msra.mxu0 %v305
  %542 = vmatpush.msra.mxu0 %v301
  %543 = vmatpush.msra.mxu0 %v297
  %544 = vmatpush.msra.mxu0 %v293
  %545 = vmatpush.msra.mxu0 %v289
  %546 = vmatpush.msra.mxu0 %v285
  %547 = vmatpush.msra.mxu0 %v281
  %548 = vmatpush.msra.mxu0 %v277
  %549 = vmatmul.f32.gmra.mxu0 %v485
  %v550 = vpop.f32.mrf.mxu0
  %v551 = vadd.f32 0.0, %v550
  %552 = vdwg.mxu0
  %553 = vmatpush.msra.mxu0 %v338
  %554 = vmatpush.msra.mxu0 %v334
  %555 = vmatpush.msra.mxu0 %v330
  %556 = vmatpush.msra.mxu0 %v326
  %557 = vmatpush.msra.mxu0 %v322
  %558 = vmatpush.msra.mxu0 %v318
  %559 = vmatpush.msra.mxu0 %v314
  %560 = vmatpush.msra.mxu0 %v310
  %561 = vmatpush.msra.mxu0 %v306
  %562 = vmatpush.msra.mxu0 %v302
  %563 = vmatpush.msra.mxu0 %v298
  %564 = vmatpush.msra.mxu0 %v294
  %565 = vmatpush.msra.mxu0 %v290
  %566 = vmatpush.msra.mxu0 %v286
  %567 = vmatpush.msra.mxu0 %v282
  %568 = vmatpush.msra.mxu0 %v278
  %569 = vmatmul.f32.gmra.mxu0 %v485
  %v570 = vpop.f32.mrf.mxu0
  %v571 = vadd.f32 0.0, %v570
  %572 = vdwg.mxu0
  %v573 = vadd.f32 %v489, %v511
  %v574 = vadd.f32 %v490, %v531
  %v575 = vadd.f32 %v491, %v551
  %v576 = vadd.f32 %v492, %v571
  %v577 = vxor.u32 %v573, 2147483648
  %v578 = vmul.f32 %v577, 1.442695
  %v579 = vpow.pop %v578
  %v580 = vadd.f32 %v579, 1.0
  %v581 = vrcp.pop %v580
  %v582 = vmul.f32 %v580, %v581
  %v583 = vsub.f32 1.0, %v582
  %v584 = vmul.f32 %v581, %v583
  %v585 = vadd.f32 %v581, %v584
  %vm586 = vweird.f32 %v580
  %vm587 = vweird.f32 %v581
  %vm588 = vmor %vm586, %vm587
  %v589 = vsel %vm588, %v581, %v585
  %v590 = vand.u32 2147483647, %v580
  %vm591 = vcmp.eq.f32.partialorder %v590, 8.507059e+37
  %v592 = vand.u32 %v580, 2147483648
  %v593 = vor.u32 1.1754944e-38, %v592
  %v594 = vsel %vm591, %v593, %v589
  %v595 = vmul.f32 1.0, %v594
  %v596 = vxor.u32 %v574, 2147483648
  %v597 = vmul.f32 %v596, 1.442695
  %v598 = vpow.pop %v597
  %v599 = vadd.f32 %v598, 1.0
  %v600 = vrcp.pop %v599
  %v601 = vmul.f32 %v599, %v600
  %v602 = vsub.f32 1.0, %v601
  %v603 = vmul.f32 %v600, %v602
  %v604 = vadd.f32 %v600, %v603
  %vm605 = vweird.f32 %v599
  %vm606 = vweird.f32 %v600
  %vm607 = vmor %vm605, %vm606
  %v608 = vsel %vm607, %v600, %v604
  %v609 = vand.u32 2147483647, %v599
  %vm610 = vcmp.eq.f32.partialorder %v609, 8.507059e+37
  %v611 = vand.u32 %v599, 2147483648
  %v612 = vor.u32 1.1754944e-38, %v611
  %v613 = vsel %vm610, %v612, %v608
  %v614 = vmul.f32 1.0, %v613
  %v615 = vtanh.pop %v575
  %v616 = vxor.u32 %v576, 2147483648
  %v617 = vmul.f32 %v616, 1.442695
  %v618 = vpow.pop %v617
  %v619 = vadd.f32 %v618, 1.0
  %v620 = vrcp.pop %v619
  %v621 = vmul.f32 %v619, %v620
  %v622 = vsub.f32 1.0, %v621
  %v623 = vmul.f32 %v620, %v622
  %v624 = vadd.f32 %v620, %v623
  %vm625 = vweird.f32 %v619
  %vm626 = vweird.f32 %v620
  %vm627 = vmor %vm625, %vm626
  %v628 = vsel %vm627, %v620, %v624
  %v629 = vand.u32 2147483647, %v619
  %vm630 = vcmp.eq.f32.partialorder %v629, 8.507059e+37
  %v631 = vand.u32 %v619, 2147483648
  %v632 = vor.u32 1.1754944e-38, %v631
  %v633 = vsel %vm630, %v632, %v628
  %v634 = vmul.f32 1.0, %v633
  %v635 = vmul.f32 %v614, %v483
  %v636 = vmul.f32 %v595, %v615
  %v637 = vadd.f32 %v635, %v636
  %v638 = vtanh.pop %v637
  %v639 = vmul.f32 %v634, %v638
  %s640 = smul.u32 2, 4
  %s641 = smul.addr %s640, 8
  %s642 = scalar_lea.vmem [#allocation2], %s641
  %v643 = vld [vmem:[%s642] sm:$0xff]
  %v644 = vld [vmem:[%s642 + $0x8] sm:$0xff]
  %v645 = vld [vmem:[%s642 + $0x10] sm:$0xff]
  %v646 = vld [vmem:[%s642 + $0x18] sm:$0xff]
  %647 = vmatpush.msra.mxu0 %v335
  %648 = vmatpush.msra.mxu0 %v331
  %649 = vmatpush.msra.mxu0 %v327
  %650 = vmatpush.msra.mxu0 %v323
  %651 = vmatpush.msra.mxu0 %v319
  %652 = vmatpush.msra.mxu0 %v315
  %653 = vmatpush.msra.mxu0 %v311
  %654 = vmatpush.msra.mxu0 %v307
  %655 = vmatpush.msra.mxu0 %v303
  %656 = vmatpush.msra.mxu0 %v299
  %657 = vmatpush.msra.mxu0 %v295
  %658 = vmatpush.msra.mxu0 %v291
  %659 = vmatpush.msra.mxu0 %v287
  %660 = vmatpush.msra.mxu0 %v283
  %661 = vmatpush.msra.mxu0 %v279
  %662 = vmatpush.msra.mxu0 %v275
  %663 = vmatmul.f32.gmra.mxu0 %v639
  %v664 = vpop.f32.mrf.mxu0
  %v665 = vadd.f32 0.0, %v664
  %666 = vdwg.mxu0
  %667 = vmatpush.msra.mxu0 %v336
  %668 = vmatpush.msra.mxu0 %v332
  %669 = vmatpush.msra.mxu0 %v328
  %670 = vmatpush.msra.mxu0 %v324
  %671 = vmatpush.msra.mxu0 %v320
  %672 = vmatpush.msra.mxu0 %v316
  %673 = vmatpush.msra.mxu0 %v312
  %674 = vmatpush.msra.mxu0 %v308
  %675 = vmatpush.msra.mxu0 %v304
  %676 = vmatpush.msra.mxu0 %v300
  %677 = vmatpush.msra.mxu0 %v296
  %678 = vmatpush.msra.mxu0 %v292
  %679 = vmatpush.msra.mxu0 %v288
  %680 = vmatpush.msra.mxu0 %v284
  %681 = vmatpush.msra.mxu0 %v280
  %682 = vmatpush.msra.mxu0 %v276
  %683 = vmatmul.f32.gmra.mxu0 %v639
  %v684 = vpop.f32.mrf.mxu0
  %v685 = vadd.f32 0.0, %v684
  %686 = vdwg.mxu0
  %687 = vmatpush.msra.mxu0 %v337
  %688 = vmatpush.msra.mxu0 %v333
  %689 = vmatpush.msra.mxu0 %v329
  %690 = vmatpush.msra.mxu0 %v325
  %691 = vmatpush.msra.mxu0 %v321
  %692 = vmatpush.msra.mxu0 %v317
  %693 = vmatpush.msra.mxu0 %v313
  %694 = vmatpush.msra.mxu0 %v309
  %695 = vmatpush.msra.mxu0 %v305
  %696 = vmatpush.msra.mxu0 %v301
  %697 = vmatpush.msra.mxu0 %v297
  %698 = vmatpush.msra.mxu0 %v293
  %699 = vmatpush.msra.mxu0 %v289
  %700 = vmatpush.msra.mxu0 %v285
  %701 = vmatpush.msra.mxu0 %v281
  %702 = vmatpush.msra.mxu0 %v277
  %703 = vmatmul.f32.gmra.mxu0 %v639
  %v704 = vpop.f32.mrf.mxu0
  %v705 = vadd.f32 0.0, %v704
  %706 = vdwg.mxu0
  %707 = vmatpush.msra.mxu0 %v338
  %708 = vmatpush.msra.mxu0 %v334
  %709 = vmatpush.msra.mxu0 %v330
  %710 = vmatpush.msra.mxu0 %v326
  %711 = vmatpush.msra.mxu0 %v322
  %712 = vmatpush.msra.mxu0 %v318
  %713 = vmatpush.msra.mxu0 %v314
  %714 = vmatpush.msra.mxu0 %v310
  %715 = vmatpush.msra.mxu0 %v306
  %716 = vmatpush.msra.mxu0 %v302
  %717 = vmatpush.msra.mxu0 %v298
  %718 = vmatpush.msra.mxu0 %v294
  %719 = vmatpush.msra.mxu0 %v290
  %720 = vmatpush.msra.mxu0 %v286
  %721 = vmatpush.msra.mxu0 %v282
  %722 = vmatpush.msra.mxu0 %v278
  %723 = vmatmul.f32.gmra.mxu0 %v639
  %v724 = vpop.f32.mrf.mxu0
  %v725 = vadd.f32 0.0, %v724
  %726 = vdwg.mxu0
  %v727 = vadd.f32 %v643, %v665
  %v728 = vadd.f32 %v644, %v685
  %v729 = vadd.f32 %v645, %v705
  %v730 = vadd.f32 %v646, %v725
  %v731 = vxor.u32 %v727, 2147483648
  %v732 = vmul.f32 %v731, 1.442695
  %v733 = vpow.pop %v732
  %v734 = vadd.f32 %v733, 1.0
  %v735 = vrcp.pop %v734
  %v736 = vmul.f32 %v734, %v735
  %v737 = vsub.f32 1.0, %v736
  %v738 = vmul.f32 %v735, %v737
  %v739 = vadd.f32 %v735, %v738
  %vm740 = vweird.f32 %v734
  %vm741 = vweird.f32 %v735
  %vm742 = vmor %vm740, %vm741
  %v743 = vsel %vm742, %v735, %v739
  %v744 = vand.u32 2147483647, %v734
  %vm745 = vcmp.eq.f32.partialorder %v744, 8.507059e+37
  %v746 = vand.u32 %v734, 2147483648
  %v747 = vor.u32 1.1754944e-38, %v746
  %v748 = vsel %vm745, %v747, %v743
  %v749 = vmul.f32 1.0, %v748
  %v750 = vxor.u32 %v728, 2147483648
  %v751 = vmul.f32 %v750, 1.442695
  %v752 = vpow.pop %v751
  %v753 = vadd.f32 %v752, 1.0
  %v754 = vrcp.pop %v753
  %v755 = vmul.f32 %v753, %v754
  %v756 = vsub.f32 1.0, %v755
  %v757 = vmul.f32 %v754, %v756
  %v758 = vadd.f32 %v754, %v757
  %vm759 = vweird.f32 %v753
  %vm760 = vweird.f32 %v754
  %vm761 = vmor %vm759, %vm760
  %v762 = vsel %vm761, %v754, %v758
  %v763 = vand.u32 2147483647, %v753
  %vm764 = vcmp.eq.f32.partialorder %v763, 8.507059e+37
  %v765 = vand.u32 %v753, 2147483648
  %v766 = vor.u32 1.1754944e-38, %v765
  %v767 = vsel %vm764, %v766, %v762
  %v768 = vmul.f32 1.0, %v767
  %v769 = vtanh.pop %v729
  %v770 = vxor.u32 %v730, 2147483648
  %v771 = vmul.f32 %v770, 1.442695
  %v772 = vpow.pop %v771
  %v773 = vadd.f32 %v772, 1.0
  %v774 = vrcp.pop %v773
  %v775 = vmul.f32 %v773, %v774
  %v776 = vsub.f32 1.0, %v775
  %v777 = vmul.f32 %v774, %v776
  %v778 = vadd.f32 %v774, %v777
  %vm779 = vweird.f32 %v773
  %vm780 = vweird.f32 %v774
  %vm781 = vmor %vm779, %vm780
  %v782 = vsel %vm781, %v774, %v778
  %v783 = vand.u32 2147483647, %v773
  %vm784 = vcmp.eq.f32.partialorder %v783, 8.507059e+37
  %v785 = vand.u32 %v773, 2147483648
  %v786 = vor.u32 1.1754944e-38, %v785
  %v787 = vsel %vm784, %v786, %v782
  %v788 = vmul.f32 1.0, %v787
  %v789 = vmul.f32 %v768, %v637
  %v790 = vmul.f32 %v749, %v769
  %v791 = vadd.f32 %v789, %v790
  %v792 = vtanh.pop %v791
  %v793 = vmul.f32 %v788, %v792
  %s794 = smul.u32 3, 4
  %s795 = smul.addr %s794, 8
  %s796 = scalar_lea.vmem [#allocation2], %s795
  %v797 = vld [vmem:[%s796] sm:$0xff]
  %v798 = vld [vmem:[%s796 + $0x8] sm:$0xff]
  %v799 = vld [vmem:[%s796 + $0x10] sm:$0xff]
  %v800 = vld [vmem:[%s796 + $0x18] sm:$0xff]
  %801 = vmatpush.msra.mxu0 %v335
  %802 = vmatpush.msra.mxu0 %v331
  %803 = vmatpush.msra.mxu0 %v327
  %804 = vmatpush.msra.mxu0 %v323
  %805 = vmatpush.msra.mxu0 %v319
  %806 = vmatpush.msra.mxu0 %v315
  %807 = vmatpush.msra.mxu0 %v311
  %808 = vmatpush.msra.mxu0 %v307
  %809 = vmatpush.msra.mxu0 %v303
  %810 = vmatpush.msra.mxu0 %v299
  %811 = vmatpush.msra.mxu0 %v295
  %812 = vmatpush.msra.mxu0 %v291
  %813 = vmatpush.msra.mxu0 %v287
  %814 = vmatpush.msra.mxu0 %v283
  %815 = vmatpush.msra.mxu0 %v279
  %816 = vmatpush.msra.mxu0 %v275
  %817 = vmatmul.f32.gmra.mxu0 %v793
  %v818 = vpop.f32.mrf.mxu0
  %v819 = vadd.f32 0.0, %v818
  %820 = vdwg.mxu0
  %821 = vmatpush.msra.mxu0 %v336
  %822 = vmatpush.msra.mxu0 %v332
  %823 = vmatpush.msra.mxu0 %v328
  %824 = vmatpush.msra.mxu0 %v324
  %825 = vmatpush.msra.mxu0 %v320
  %826 = vmatpush.msra.mxu0 %v316
  %827 = vmatpush.msra.mxu0 %v312
  %828 = vmatpush.msra.mxu0 %v308
  %829 = vmatpush.msra.mxu0 %v304
  %830 = vmatpush.msra.mxu0 %v300
  %831 = vmatpush.msra.mxu0 %v296
  %832 = vmatpush.msra.mxu0 %v292
  %833 = vmatpush.msra.mxu0 %v288
  %834 = vmatpush.msra.mxu0 %v284
  %835 = vmatpush.msra.mxu0 %v280
  %836 = vmatpush.msra.mxu0 %v276
  %837 = vmatmul.f32.gmra.mxu0 %v793
  %v838 = vpop.f32.mrf.mxu0
  %v839 = vadd.f32 0.0, %v838
  %840 = vdwg.mxu0
  %841 = vmatpush.msra.mxu0 %v337
  %842 = vmatpush.msra.mxu0 %v333
  %843 = vmatpush.msra.mxu0 %v329
  %844 = vmatpush.msra.mxu0 %v325
  %845 = vmatpush.msra.mxu0 %v321
  %846 = vmatpush.msra.mxu0 %v317
  %847 = vmatpush.msra.mxu0 %v313
  %848 = vmatpush.msra.mxu0 %v309
  %849 = vmatpush.msra.mxu0 %v305
  %850 = vmatpush.msra.mxu0 %v301
  %851 = vmatpush.msra.mxu0 %v297
  %852 = vmatpush.msra.mxu0 %v293
  %853 = vmatpush.msra.mxu0 %v289
  %854 = vmatpush.msra.mxu0 %v285
  %855 = vmatpush.msra.mxu0 %v281
  %856 = vmatpush.msra.mxu0 %v277
  %857 = vmatmul.f32.gmra.mxu0 %v793
  %v858 = vpop.f32.mrf.mxu0
  %v859 = vadd.f32 0.0, %v858
  %860 = vdwg.mxu0
  %861 = vmatpush.msra.mxu0 %v338
  %862 = vmatpush.msra.mxu0 %v334
  %863 = vmatpush.msra.mxu0 %v330
  %864 = vmatpush.msra.mxu0 %v326
  %865 = vmatpush.msra.mxu0 %v322
  %866 = vmatpush.msra.mxu0 %v318
  %867 = vmatpush.msra.mxu0 %v314
  %868 = vmatpush.msra.mxu0 %v310
  %869 = vmatpush.msra.mxu0 %v306
  %870 = vmatpush.msra.mxu0 %v302
  %871 = vmatpush.msra.mxu0 %v298
  %872 = vmatpush.msra.mxu0 %v294
  %873 = vmatpush.msra.mxu0 %v290
  %874 = vmatpush.msra.mxu0 %v286
  %875 = vmatpush.msra.mxu0 %v282
  %876 = vmatpush.msra.mxu0 %v278
  %877 = vmatmul.f32.gmra.mxu0 %v793
  %v878 = vpop.f32.mrf.mxu0
  %v879 = vadd.f32 0.0, %v878
  %880 = vdwg.mxu0
  %v881 = vadd.f32 %v797, %v819
  %v882 = vadd.f32 %v798, %v839
  %v883 = vadd.f32 %v799, %v859
  %v884 = vadd.f32 %v800, %v879
  %v885 = vxor.u32 %v881, 2147483648
  %v886 = vmul.f32 %v885, 1.442695
  %v887 = vpow.pop %v886
  %v888 = vadd.f32 %v887, 1.0
  %v889 = vrcp.pop %v888
  %v890 = vmul.f32 %v888, %v889
  %v891 = vsub.f32 1.0, %v890
  %v892 = vmul.f32 %v889, %v891
  %v893 = vadd.f32 %v889, %v892
  %vm894 = vweird.f32 %v888
  %vm895 = vweird.f32 %v889
  %vm896 = vmor %vm894, %vm895
  %v897 = vsel %vm896, %v889, %v893
  %v898 = vand.u32 2147483647, %v888
  %vm899 = vcmp.eq.f32.partialorder %v898, 8.507059e+37
  %v900 = vand.u32 %v888, 2147483648
  %v901 = vor.u32 1.1754944e-38, %v900
  %v902 = vsel %vm899, %v901, %v897
  %v903 = vmul.f32 1.0, %v902
  %v904 = vxor.u32 %v882, 2147483648
  %v905 = vmul.f32 %v904, 1.442695
  %v906 = vpow.pop %v905
  %v907 = vadd.f32 %v906, 1.0
  %v908 = vrcp.pop %v907
  %v909 = vmul.f32 %v907, %v908
  %v910 = vsub.f32 1.0, %v909
  %v911 = vmul.f32 %v908, %v910
  %v912 = vadd.f32 %v908, %v911
  %vm913 = vweird.f32 %v907
  %vm914 = vweird.f32 %v908
  %vm915 = vmor %vm913, %vm914
  %v916 = vsel %vm915, %v908, %v912
  %v917 = vand.u32 2147483647, %v907
  %vm918 = vcmp.eq.f32.partialorder %v917, 8.507059e+37
  %v919 = vand.u32 %v907, 2147483648
  %v920 = vor.u32 1.1754944e-38, %v919
  %v921 = vsel %vm918, %v920, %v916
  %v922 = vmul.f32 1.0, %v921
  %v923 = vtanh.pop %v883
  %v924 = vxor.u32 %v884, 2147483648
  %v925 = vmul.f32 %v924, 1.442695
  %v926 = vpow.pop %v925
  %v927 = vadd.f32 %v926, 1.0
  %v928 = vrcp.pop %v927
  %v929 = vmul.f32 %v927, %v928
  %v930 = vsub.f32 1.0, %v929
  %v931 = vmul.f32 %v928, %v930
  %v932 = vadd.f32 %v928, %v931
  %vm933 = vweird.f32 %v927
  %vm934 = vweird.f32 %v928
  %vm935 = vmor %vm933, %vm934
  %v936 = vsel %vm935, %v928, %v932
  %v937 = vand.u32 2147483647, %v927
  %vm938 = vcmp.eq.f32.partialorder %v937, 8.507059e+37
  %v939 = vand.u32 %v927, 2147483648
  %v940 = vor.u32 1.1754944e-38, %v939
  %v941 = vsel %vm938, %v940, %v936
  %v942 = vmul.f32 1.0, %v941
  %v943 = vmul.f32 %v922, %v791
  %v944 = vmul.f32 %v903, %v923
  %v945 = vadd.f32 %v943, %v944
  %v946 = vtanh.pop %v945
  %v947 = vmul.f32 %v942, %v946
  %s948 = smul.u32 4, 4
  %s949 = smul.addr %s948, 8
  %s950 = scalar_lea.vmem [#allocation2], %s949
  %v951 = vld [vmem:[%s950] sm:$0xff]
  %v952 = vld [vmem:[%s950 + $0x8] sm:$0xff]
  %v953 = vld [vmem:[%s950 + $0x10] sm:$0xff]
  %v954 = vld [vmem:[%s950 + $0x18] sm:$0xff]
  %955 = vmatpush.msra.mxu0 %v335
  %956 = vmatpush.msra.mxu0 %v331
  %957 = vmatpush.msra.mxu0 %v327
  %958 = vmatpush.msra.mxu0 %v323
  %959 = vmatpush.msra.mxu0 %v319
  %960 = vmatpush.msra.mxu0 %v315
  %961 = vmatpush.msra.mxu0 %v311
  %962 = vmatpush.msra.mxu0 %v307
  %963 = vmatpush.msra.mxu0 %v303
  %964 = vmatpush.msra.mxu0 %v299
  %965 = vmatpush.msra.mxu0 %v295
  %966 = vmatpush.msra.mxu0 %v291
  %967 = vmatpush.msra.mxu0 %v287
  %968 = vmatpush.msra.mxu0 %v283
  %969 = vmatpush.msra.mxu0 %v279
  %970 = vmatpush.msra.mxu0 %v275
  %971 = vmatmul.f32.gmra.mxu0 %v947
  %v972 = vpop.f32.mrf.mxu0
  %v973 = vadd.f32 0.0, %v972
  %974 = vdwg.mxu0
  %975 = vmatpush.msra.mxu0 %v336
  %976 = vmatpush.msra.mxu0 %v332
  %977 = vmatpush.msra.mxu0 %v328
  %978 = vmatpush.msra.mxu0 %v324
  %979 = vmatpush.msra.mxu0 %v320
  %980 = vmatpush.msra.mxu0 %v316
  %981 = vmatpush.msra.mxu0 %v312
  %982 = vmatpush.msra.mxu0 %v308
  %983 = vmatpush.msra.mxu0 %v304
  %984 = vmatpush.msra.mxu0 %v300
  %985 = vmatpush.msra.mxu0 %v296
  %986 = vmatpush.msra.mxu0 %v292
  %987 = vmatpush.msra.mxu0 %v288
  %988 = vmatpush.msra.mxu0 %v284
  %989 = vmatpush.msra.mxu0 %v280
  %990 = vmatpush.msra.mxu0 %v276
  %991 = vmatmul.f32.gmra.mxu0 %v947
  %v992 = vpop.f32.mrf.mxu0
  %v993 = vadd.f32 0.0, %v992
  %994 = vdwg.mxu0
  %995 = vmatpush.msra.mxu0 %v337
  %996 = vmatpush.msra.mxu0 %v333
  %997 = vmatpush.msra.mxu0 %v329
  %998 = vmatpush.msra.mxu0 %v325
  %999 = vmatpush.msra.mxu0 %v321
  %1000 = vmatpush.msra.mxu0 %v317
  %1001 = vmatpush.msra.mxu0 %v313
  %1002 = vmatpush.msra.mxu0 %v309
  %1003 = vmatpush.msra.mxu0 %v305
  %1004 = vmatpush.msra.mxu0 %v301
  %1005 = vmatpush.msra.mxu0 %v297
  %1006 = vmatpush.msra.mxu0 %v293
  %1007 = vmatpush.msra.mxu0 %v289
  %1008 = vmatpush.msra.mxu0 %v285
  %1009 = vmatpush.msra.mxu0 %v281
  %1010 = vmatpush.msra.mxu0 %v277
  %1011 = vmatmul.f32.gmra.mxu0 %v947
  %v1012 = vpop.f32.mrf.mxu0
  %v1013 = vadd.f32 0.0, %v1012
  %1014 = vdwg.mxu0
  %1015 = vmatpush.msra.mxu0 %v338
  %1016 = vmatpush.msra.mxu0 %v334
  %1017 = vmatpush.msra.mxu0 %v330
  %1018 = vmatpush.msra.mxu0 %v326
  %1019 = vmatpush.msra.mxu0 %v322
  %1020 = vmatpush.msra.mxu0 %v318
  %1021 = vmatpush.msra.mxu0 %v314
  %1022 = vmatpush.msra.mxu0 %v310
  %1023 = vmatpush.msra.mxu0 %v306
  %1024 = vmatpush.msra.mxu0 %v302
  %1025 = vmatpush.msra.mxu0 %v298
  %1026 = vmatpush.msra.mxu0 %v294
  %1027 = vmatpush.msra.mxu0 %v290
  %1028 = vmatpush.msra.mxu0 %v286
  %1029 = vmatpush.msra.mxu0 %v282
  %1030 = vmatpush.msra.mxu0 %v278
  %1031 = vmatmul.f32.gmra.mxu0 %v947
  %v1032 = vpop.f32.mrf.mxu0
  %v1033 = vadd.f32 0.0, %v1032
  %1034 = vdwg.mxu0
  %v1035 = vadd.f32 %v951, %v973
  %v1036 = vadd.f32 %v952, %v993
  %v1037 = vadd.f32 %v953, %v1013
  %v1038 = vadd.f32 %v954, %v1033
  %v1039 = vxor.u32 %v1035, 2147483648
  %v1040 = vmul.f32 %v1039, 1.442695
  %v1041 = vpow.pop %v1040
  %v1042 = vadd.f32 %v1041, 1.0
  %v1043 = vrcp.pop %v1042
  %v1044 = vmul.f32 %v1042, %v1043
  %v1045 = vsub.f32 1.0, %v1044
  %v1046 = vmul.f32 %v1043, %v1045
  %v1047 = vadd.f32 %v1043, %v1046
  %vm1048 = vweird.f32 %v1042
  %vm1049 = vweird.f32 %v1043
  %vm1050 = vmor %vm1048, %vm1049
  %v1051 = vsel %vm1050, %v1043, %v1047
  %v1052 = vand.u32 2147483647, %v1042
  %vm1053 = vcmp.eq.f32.partialorder %v1052, 8.507059e+37
  %v1054 = vand.u32 %v1042, 2147483648
  %v1055 = vor.u32 1.1754944e-38, %v1054
  %v1056 = vsel %vm1053, %v1055, %v1051
  %v1057 = vmul.f32 1.0, %v1056
  %v1058 = vxor.u32 %v1036, 2147483648
  %v1059 = vmul.f32 %v1058, 1.442695
  %v1060 = vpow.pop %v1059
  %v1061 = vadd.f32 %v1060, 1.0
  %v1062 = vrcp.pop %v1061
  %v1063 = vmul.f32 %v1061, %v1062
  %v1064 = vsub.f32 1.0, %v1063
  %v1065 = vmul.f32 %v1062, %v1064
  %v1066 = vadd.f32 %v1062, %v1065
  %vm1067 = vweird.f32 %v1061
  %vm1068 = vweird.f32 %v1062
  %vm1069 = vmor %vm1067, %vm1068
  %v1070 = vsel %vm1069, %v1062, %v1066
  %v1071 = vand.u32 2147483647, %v1061
  %vm1072 = vcmp.eq.f32.partialorder %v1071, 8.507059e+37
  %v1073 = vand.u32 %v1061, 2147483648
  %v1074 = vor.u32 1.1754944e-38, %v1073
  %v1075 = vsel %vm1072, %v1074, %v1070
  %v1076 = vmul.f32 1.0, %v1075
  %v1077 = vtanh.pop %v1037
  %v1078 = vxor.u32 %v1038, 2147483648
  %v1079 = vmul.f32 %v1078, 1.442695
  %v1080 = vpow.pop %v1079
  %v1081 = vadd.f32 %v1080, 1.0
  %v1082 = vrcp.pop %v1081
  %v1083 = vmul.f32 %v1081, %v1082
  %v1084 = vsub.f32 1.0, %v1083
  %v1085 = vmul.f32 %v1082, %v1084
  %v1086 = vadd.f32 %v1082, %v1085
  %vm1087 = vweird.f32 %v1081
  %vm1088 = vweird.f32 %v1082
  %vm1089 = vmor %vm1087, %vm1088
  %v1090 = vsel %vm1089, %v1082, %v1086
  %v1091 = vand.u32 2147483647, %v1081
  %vm1092 = vcmp.eq.f32.partialorder %v1091, 8.507059e+37
  %v1093 = vand.u32 %v1081, 2147483648
  %v1094 = vor.u32 1.1754944e-38, %v1093
  %v1095 = vsel %vm1092, %v1094, %v1090
  %v1096 = vmul.f32 1.0, %v1095
  %v1097 = vmul.f32 %v1076, %v945
  %v1098 = vmul.f32 %v1057, %v1077
  %v1099 = vadd.f32 %v1097, %v1098
  %v1100 = vtanh.pop %v1099
  %v1101 = vmul.f32 %v1096, %v1100
  %s1102 = smul.u32 5, 4
  %s1103 = smul.addr %s1102, 8
  %s1104 = scalar_lea.vmem [#allocation2], %s1103
  %v1105 = vld [vmem:[%s1104] sm:$0xff]
  %v1106 = vld [vmem:[%s1104 + $0x8] sm:$0xff]
  %v1107 = vld [vmem:[%s1104 + $0x10] sm:$0xff]
  %v1108 = vld [vmem:[%s1104 + $0x18] sm:$0xff]
  %1109 = vmatpush.msra.mxu0 %v335
  %1110 = vmatpush.msra.mxu0 %v331
  %1111 = vmatpush.msra.mxu0 %v327
  %1112 = vmatpush.msra.mxu0 %v323
  %1113 = vmatpush.msra.mxu0 %v319
  %1114 = vmatpush.msra.mxu0 %v315
  %1115 = vmatpush.msra.mxu0 %v311
  %1116 = vmatpush.msra.mxu0 %v307
  %1117 = vmatpush.msra.mxu0 %v303
  %1118 = vmatpush.msra.mxu0 %v299
  %1119 = vmatpush.msra.mxu0 %v295
  %1120 = vmatpush.msra.mxu0 %v291
  %1121 = vmatpush.msra.mxu0 %v287
  %1122 = vmatpush.msra.mxu0 %v283
  %1123 = vmatpush.msra.mxu0 %v279
  %1124 = vmatpush.msra.mxu0 %v275
  %1125 = vmatmul.f32.gmra.mxu0 %v1101
  %v1126 = vpop.f32.mrf.mxu0
  %v1127 = vadd.f32 0.0, %v1126
  %1128 = vdwg.mxu0
  %1129 = vmatpush.msra.mxu0 %v336
  %1130 = vmatpush.msra.mxu0 %v332
  %1131 = vmatpush.msra.mxu0 %v328
  %1132 = vmatpush.msra.mxu0 %v324
  %1133 = vmatpush.msra.mxu0 %v320
  %1134 = vmatpush.msra.mxu0 %v316
  %1135 = vmatpush.msra.mxu0 %v312
  %1136 = vmatpush.msra.mxu0 %v308
  %1137 = vmatpush.msra.mxu0 %v304
  %1138 = vmatpush.msra.mxu0 %v300
  %1139 = vmatpush.msra.mxu0 %v296
  %1140 = vmatpush.msra.mxu0 %v292
  %1141 = vmatpush.msra.mxu0 %v288
  %1142 = vmatpush.msra.mxu0 %v284
  %1143 = vmatpush.msra.mxu0 %v280
  %1144 = vmatpush.msra.mxu0 %v276
  %1145 = vmatmul.f32.gmra.mxu0 %v1101
  %v1146 = vpop.f32.mrf.mxu0
  %v1147 = vadd.f32 0.0, %v1146
  %1148 = vdwg.mxu0
  %1149 = vmatpush.msra.mxu0 %v337
  %1150 = vmatpush.msra.mxu0 %v333
  %1151 = vmatpush.msra.mxu0 %v329
  %1152 = vmatpush.msra.mxu0 %v325
  %1153 = vmatpush.msra.mxu0 %v321
  %1154 = vmatpush.msra.mxu0 %v317
  %1155 = vmatpush.msra.mxu0 %v313
  %1156 = vmatpush.msra.mxu0 %v309
  %1157 = vmatpush.msra.mxu0 %v305
  %1158 = vmatpush.msra.mxu0 %v301
  %1159 = vmatpush.msra.mxu0 %v297
  %1160 = vmatpush.msra.mxu0 %v293
  %1161 = vmatpush.msra.mxu0 %v289
  %1162 = vmatpush.msra.mxu0 %v285
  %1163 = vmatpush.msra.mxu0 %v281
  %1164 = vmatpush.msra.mxu0 %v277
  %1165 = vmatmul.f32.gmra.mxu0 %v1101
  %v1166 = vpop.f32.mrf.mxu0
  %v1167 = vadd.f32 0.0, %v1166
  %1168 = vdwg.mxu0
  %1169 = vmatpush.msra.mxu0 %v338
  %1170 = vmatpush.msra.mxu0 %v334
  %1171 = vmatpush.msra.mxu0 %v330
  %1172 = vmatpush.msra.mxu0 %v326
  %1173 = vmatpush.msra.mxu0 %v322
  %1174 = vmatpush.msra.mxu0 %v318
  %1175 = vmatpush.msra.mxu0 %v314
  %1176 = vmatpush.msra.mxu0 %v310
  %1177 = vmatpush.msra.mxu0 %v306
  %1178 = vmatpush.msra.mxu0 %v302
  %1179 = vmatpush.msra.mxu0 %v298
  %1180 = vmatpush.msra.mxu0 %v294
  %1181 = vmatpush.msra.mxu0 %v290
  %1182 = vmatpush.msra.mxu0 %v286
  %1183 = vmatpush.msra.mxu0 %v282
  %1184 = vmatpush.msra.mxu0 %v278
  %1185 = vmatmul.f32.gmra.mxu0 %v1101
  %v1186 = vpop.f32.mrf.mxu0
  %v1187 = vadd.f32 0.0, %v1186
  %1188 = vdwg.mxu0
  %v1189 = vadd.f32 %v1105, %v1127
  %v1190 = vadd.f32 %v1106, %v1147
  %v1191 = vadd.f32 %v1107, %v1167
  %v1192 = vadd.f32 %v1108, %v1187
  %v1193 = vxor.u32 %v1189, 2147483648
  %v1194 = vmul.f32 %v1193, 1.442695
  %v1195 = vpow.pop %v1194
  %v1196 = vadd.f32 %v1195, 1.0
  %v1197 = vrcp.pop %v1196
  %v1198 = vmul.f32 %v1196, %v1197
  %v1199 = vsub.f32 1.0, %v1198
  %v1200 = vmul.f32 %v1197, %v1199
  %v1201 = vadd.f32 %v1197, %v1200
  %vm1202 = vweird.f32 %v1196
  %vm1203 = vweird.f32 %v1197
  %vm1204 = vmor %vm1202, %vm1203
  %v1205 = vsel %vm1204, %v1197, %v1201
  %v1206 = vand.u32 2147483647, %v1196
  %vm1207 = vcmp.eq.f32.partialorder %v1206, 8.507059e+37
  %v1208 = vand.u32 %v1196, 2147483648
  %v1209 = vor.u32 1.1754944e-38, %v1208
  %v1210 = vsel %vm1207, %v1209, %v1205
  %v1211 = vmul.f32 1.0, %v1210
  %v1212 = vxor.u32 %v1190, 2147483648
  %v1213 = vmul.f32 %v1212, 1.442695
  %v1214 = vpow.pop %v1213
  %v1215 = vadd.f32 %v1214, 1.0
  %v1216 = vrcp.pop %v1215
  %v1217 = vmul.f32 %v1215, %v1216
  %v1218 = vsub.f32 1.0, %v1217
  %v1219 = vmul.f32 %v1216, %v1218
  %v1220 = vadd.f32 %v1216, %v1219
  %vm1221 = vweird.f32 %v1215
  %vm1222 = vweird.f32 %v1216
  %vm1223 = vmor %vm1221, %vm1222
  %v1224 = vsel %vm1223, %v1216, %v1220
  %v1225 = vand.u32 2147483647, %v1215
  %vm1226 = vcmp.eq.f32.partialorder %v1225, 8.507059e+37
  %v1227 = vand.u32 %v1215, 2147483648
  %v1228 = vor.u32 1.1754944e-38, %v1227
  %v1229 = vsel %vm1226, %v1228, %v1224
  %v1230 = vmul.f32 1.0, %v1229
  %v1231 = vtanh.pop %v1191
  %v1232 = vxor.u32 %v1192, 2147483648
  %v1233 = vmul.f32 %v1232, 1.442695
  %v1234 = vpow.pop %v1233
  %v1235 = vadd.f32 %v1234, 1.0
  %v1236 = vrcp.pop %v1235
  %v1237 = vmul.f32 %v1235, %v1236
  %v1238 = vsub.f32 1.0, %v1237
  %v1239 = vmul.f32 %v1236, %v1238
  %v1240 = vadd.f32 %v1236, %v1239
  %vm1241 = vweird.f32 %v1235
  %vm1242 = vweird.f32 %v1236
  %vm1243 = vmor %vm1241, %vm1242
  %v1244 = vsel %vm1243, %v1236, %v1240
  %v1245 = vand.u32 2147483647, %v1235
  %vm1246 = vcmp.eq.f32.partialorder %v1245, 8.507059e+37
  %v1247 = vand.u32 %v1235, 2147483648
  %v1248 = vor.u32 1.1754944e-38, %v1247
  %v1249 = vsel %vm1246, %v1248, %v1244
  %v1250 = vmul.f32 1.0, %v1249
  %v1251 = vmul.f32 %v1230, %v1099
  %v1252 = vmul.f32 %v1211, %v1231
  %v1253 = vadd.f32 %v1251, %v1252
  %v1254 = vtanh.pop %v1253
  %v1255 = vmul.f32 %v1250, %v1254
  %s1256 = smul.u32 6, 4
  %s1257 = smul.addr %s1256, 8
  %s1258 = scalar_lea.vmem [#allocation2], %s1257
  %v1259 = vld [vmem:[%s1258] sm:$0xff]
  %v1260 = vld [vmem:[%s1258 + $0x8] sm:$0xff]
  %v1261 = vld [vmem:[%s1258 + $0x10] sm:$0xff]
  %v1262 = vld [vmem:[%s1258 + $0x18] sm:$0xff]
  %1263 = vmatpush.msra.mxu0 %v335
  %1264 = vmatpush.msra.mxu0 %v331
  %1265 = vmatpush.msra.mxu0 %v327
  %1266 = vmatpush.msra.mxu0 %v323
  %1267 = vmatpush.msra.mxu0 %v319
  %1268 = vmatpush.msra.mxu0 %v315
  %1269 = vmatpush.msra.mxu0 %v311
  %1270 = vmatpush.msra.mxu0 %v307
  %1271 = vmatpush.msra.mxu0 %v303
  %1272 = vmatpush.msra.mxu0 %v299
  %1273 = vmatpush.msra.mxu0 %v295
  %1274 = vmatpush.msra.mxu0 %v291
  %1275 = vmatpush.msra.mxu0 %v287
  %1276 = vmatpush.msra.mxu0 %v283
  %1277 = vmatpush.msra.mxu0 %v279
  %1278 = vmatpush.msra.mxu0 %v275
  %1279 = vmatmul.f32.gmra.mxu0 %v1255
  %v1280 = vpop.f32.mrf.mxu0
  %v1281 = vadd.f32 0.0, %v1280
  %1282 = vdwg.mxu0
  %1283 = vmatpush.msra.mxu0 %v336
  %1284 = vmatpush.msra.mxu0 %v332
  %1285 = vmatpush.msra.mxu0 %v328
  %1286 = vmatpush.msra.mxu0 %v324
  %1287 = vmatpush.msra.mxu0 %v320
  %1288 = vmatpush.msra.mxu0 %v316
  %1289 = vmatpush.msra.mxu0 %v312
  %1290 = vmatpush.msra.mxu0 %v308
  %1291 = vmatpush.msra.mxu0 %v304
  %1292 = vmatpush.msra.mxu0 %v300
  %1293 = vmatpush.msra.mxu0 %v296
  %1294 = vmatpush.msra.mxu0 %v292
  %1295 = vmatpush.msra.mxu0 %v288
  %1296 = vmatpush.msra.mxu0 %v284
  %1297 = vmatpush.msra.mxu0 %v280
  %1298 = vmatpush.msra.mxu0 %v276
  %1299 = vmatmul.f32.gmra.mxu0 %v1255
  %v1300 = vpop.f32.mrf.mxu0
  %v1301 = vadd.f32 0.0, %v1300
  %1302 = vdwg.mxu0
  %1303 = vmatpush.msra.mxu0 %v337
  %1304 = vmatpush.msra.mxu0 %v333
  %1305 = vmatpush.msra.mxu0 %v329
  %1306 = vmatpush.msra.mxu0 %v325
  %1307 = vmatpush.msra.mxu0 %v321
  %1308 = vmatpush.msra.mxu0 %v317
  %1309 = vmatpush.msra.mxu0 %v313
  %1310 = vmatpush.msra.mxu0 %v309
  %1311 = vmatpush.msra.mxu0 %v305
  %1312 = vmatpush.msra.mxu0 %v301
  %1313 = vmatpush.msra.mxu0 %v297
  %1314 = vmatpush.msra.mxu0 %v293
  %1315 = vmatpush.msra.mxu0 %v289
  %1316 = vmatpush.msra.mxu0 %v285
  %1317 = vmatpush.msra.mxu0 %v281
  %1318 = vmatpush.msra.mxu0 %v277
  %1319 = vmatmul.f32.gmra.mxu0 %v1255
  %v1320 = vpop.f32.mrf.mxu0
  %v1321 = vadd.f32 0.0, %v1320
  %1322 = vdwg.mxu0
  %1323 = vmatpush.msra.mxu0 %v338
  %1324 = vmatpush.msra.mxu0 %v334
  %1325 = vmatpush.msra.mxu0 %v330
  %1326 = vmatpush.msra.mxu0 %v326
  %1327 = vmatpush.msra.mxu0 %v322
  %1328 = vmatpush.msra.mxu0 %v318
  %1329 = vmatpush.msra.mxu0 %v314
  %1330 = vmatpush.msra.mxu0 %v310
  %1331 = vmatpush.msra.mxu0 %v306
  %1332 = vmatpush.msra.mxu0 %v302
  %1333 = vmatpush.msra.mxu0 %v298
  %1334 = vmatpush.msra.mxu0 %v294
  %1335 = vmatpush.msra.mxu0 %v290
  %1336 = vmatpush.msra.mxu0 %v286
  %1337 = vmatpush.msra.mxu0 %v282
  %1338 = vmatpush.msra.mxu0 %v278
  %1339 = vmatmul.f32.gmra.mxu0 %v1255
  %v1340 = vpop.f32.mrf.mxu0
  %v1341 = vadd.f32 0.0, %v1340
  %1342 = vdwg.mxu0
  %v1343 = vadd.f32 %v1259, %v1281
  %v1344 = vadd.f32 %v1260, %v1301
  %v1345 = vadd.f32 %v1261, %v1321
  %v1346 = vadd.f32 %v1262, %v1341
  %v1347 = vxor.u32 %v1343, 2147483648
  %v1348 = vmul.f32 %v1347, 1.442695
  %v1349 = vpow.pop %v1348
  %v1350 = vadd.f32 %v1349, 1.0
  %v1351 = vrcp.pop %v1350
  %v1352 = vmul.f32 %v1350, %v1351
  %v1353 = vsub.f32 1.0, %v1352
  %v1354 = vmul.f32 %v1351, %v1353
  %v1355 = vadd.f32 %v1351, %v1354
  %vm1356 = vweird.f32 %v1350
  %vm1357 = vweird.f32 %v1351
  %vm1358 = vmor %vm1356, %vm1357
  %v1359 = vsel %vm1358, %v1351, %v1355
  %v1360 = vand.u32 2147483647, %v1350
  %vm1361 = vcmp.eq.f32.partialorder %v1360, 8.507059e+37
  %v1362 = vand.u32 %v1350, 2147483648
  %v1363 = vor.u32 1.1754944e-38, %v1362
  %v1364 = vsel %vm1361, %v1363, %v1359
  %v1365 = vmul.f32 1.0, %v1364
  %v1366 = vxor.u32 %v1344, 2147483648
  %v1367 = vmul.f32 %v1366, 1.442695
  %v1368 = vpow.pop %v1367
  %v1369 = vadd.f32 %v1368, 1.0
  %v1370 = vrcp.pop %v1369
  %v1371 = vmul.f32 %v1369, %v1370
  %v1372 = vsub.f32 1.0, %v1371
  %v1373 = vmul.f32 %v1370, %v1372
  %v1374 = vadd.f32 %v1370, %v1373
  %vm1375 = vweird.f32 %v1369
  %vm1376 = vweird.f32 %v1370
  %vm1377 = vmor %vm1375, %vm1376
  %v1378 = vsel %vm1377, %v1370, %v1374
  %v1379 = vand.u32 2147483647, %v1369
  %vm1380 = vcmp.eq.f32.partialorder %v1379, 8.507059e+37
  %v1381 = vand.u32 %v1369, 2147483648
  %v1382 = vor.u32 1.1754944e-38, %v1381
  %v1383 = vsel %vm1380, %v1382, %v1378
  %v1384 = vmul.f32 1.0, %v1383
  %v1385 = vtanh.pop %v1345
  %v1386 = vxor.u32 %v1346, 2147483648
  %v1387 = vmul.f32 %v1386, 1.442695
  %v1388 = vpow.pop %v1387
  %v1389 = vadd.f32 %v1388, 1.0
  %v1390 = vrcp.pop %v1389
  %v1391 = vmul.f32 %v1389, %v1390
  %v1392 = vsub.f32 1.0, %v1391
  %v1393 = vmul.f32 %v1390, %v1392
  %v1394 = vadd.f32 %v1390, %v1393
  %vm1395 = vweird.f32 %v1389
  %vm1396 = vweird.f32 %v1390
  %vm1397 = vmor %vm1395, %vm1396
  %v1398 = vsel %vm1397, %v1390, %v1394
  %v1399 = vand.u32 2147483647, %v1389
  %vm1400 = vcmp.eq.f32.partialorder %v1399, 8.507059e+37
  %v1401 = vand.u32 %v1389, 2147483648
  %v1402 = vor.u32 1.1754944e-38, %v1401
  %v1403 = vsel %vm1400, %v1402, %v1398
  %v1404 = vmul.f32 1.0, %v1403
  %v1405 = vmul.f32 %v1384, %v1253
  %v1406 = vmul.f32 %v1365, %v1385
  %v1407 = vadd.f32 %v1405, %v1406
  %v1408 = vtanh.pop %v1407
  %v1409 = vmul.f32 %v1404, %v1408
  %s1410 = smul.u32 7, 4
  %s1411 = smul.addr %s1410, 8
  %s1412 = scalar_lea.vmem [#allocation2], %s1411
  %v1413 = vld [vmem:[%s1412] sm:$0xff]
  %v1414 = vld [vmem:[%s1412 + $0x8] sm:$0xff]
  %v1415 = vld [vmem:[%s1412 + $0x10] sm:$0xff]
  %v1416 = vld [vmem:[%s1412 + $0x18] sm:$0xff]
  %1417 = vmatpush.msra.mxu0 %v335
  %1418 = vmatpush.msra.mxu0 %v331
  %1419 = vmatpush.msra.mxu0 %v327
  %1420 = vmatpush.msra.mxu0 %v323
  %1421 = vmatpush.msra.mxu0 %v319
  %1422 = vmatpush.msra.mxu0 %v315
  %1423 = vmatpush.msra.mxu0 %v311
  %1424 = vmatpush.msra.mxu0 %v307
  %1425 = vmatpush.msra.mxu0 %v303
  %1426 = vmatpush.msra.mxu0 %v299
  %1427 = vmatpush.msra.mxu0 %v295
  %1428 = vmatpush.msra.mxu0 %v291
  %1429 = vmatpush.msra.mxu0 %v287
  %1430 = vmatpush.msra.mxu0 %v283
  %1431 = vmatpush.msra.mxu0 %v279
  %1432 = vmatpush.msra.mxu0 %v275
  %1433 = vmatmul.f32.gmra.mxu0 %v1409
  %v1434 = vpop.f32.mrf.mxu0
  %v1435 = vadd.f32 0.0, %v1434
  %1436 = vdwg.mxu0
  %1437 = vmatpush.msra.mxu0 %v336
  %1438 = vmatpush.msra.mxu0 %v332
  %1439 = vmatpush.msra.mxu0 %v328
  %1440 = vmatpush.msra.mxu0 %v324
  %1441 = vmatpush.msra.mxu0 %v320
  %1442 = vmatpush.msra.mxu0 %v316
  %1443 = vmatpush.msra.mxu0 %v312
  %1444 = vmatpush.msra.mxu0 %v308
  %1445 = vmatpush.msra.mxu0 %v304
  %1446 = vmatpush.msra.mxu0 %v300
  %1447 = vmatpush.msra.mxu0 %v296
  %1448 = vmatpush.msra.mxu0 %v292
  %1449 = vmatpush.msra.mxu0 %v288
  %1450 = vmatpush.msra.mxu0 %v284
  %1451 = vmatpush.msra.mxu0 %v280
  %1452 = vmatpush.msra.mxu0 %v276
  %1453 = vmatmul.f32.gmra.mxu0 %v1409
  %v1454 = vpop.f32.mrf.mxu0
  %v1455 = vadd.f32 0.0, %v1454
  %1456 = vdwg.mxu0
  %1457 = vmatpush.msra.mxu0 %v337
  %1458 = vmatpush.msra.mxu0 %v333
  %1459 = vmatpush.msra.mxu0 %v329
  %1460 = vmatpush.msra.mxu0 %v325
  %1461 = vmatpush.msra.mxu0 %v321
  %1462 = vmatpush.msra.mxu0 %v317
  %1463 = vmatpush.msra.mxu0 %v313
  %1464 = vmatpush.msra.mxu0 %v309
  %1465 = vmatpush.msra.mxu0 %v305
  %1466 = vmatpush.msra.mxu0 %v301
  %1467 = vmatpush.msra.mxu0 %v297
  %1468 = vmatpush.msra.mxu0 %v293
  %1469 = vmatpush.msra.mxu0 %v289
  %1470 = vmatpush.msra.mxu0 %v285
  %1471 = vmatpush.msra.mxu0 %v281
  %1472 = vmatpush.msra.mxu0 %v277
  %1473 = vmatmul.f32.gmra.mxu0 %v1409
  %v1474 = vpop.f32.mrf.mxu0
  %v1475 = vadd.f32 0.0, %v1474
  %1476 = vdwg.mxu0
  %1477 = vmatpush.msra.mxu0 %v338
  %1478 = vmatpush.msra.mxu0 %v334
  %1479 = vmatpush.msra.mxu0 %v330
  %1480 = vmatpush.msra.mxu0 %v326
  %1481 = vmatpush.msra.mxu0 %v322
  %1482 = vmatpush.msra.mxu0 %v318
  %1483 = vmatpush.msra.mxu0 %v314
  %1484 = vmatpush.msra.mxu0 %v310
  %1485 = vmatpush.msra.mxu0 %v306
  %1486 = vmatpush.msra.mxu0 %v302
  %1487 = vmatpush.msra.mxu0 %v298
  %1488 = vmatpush.msra.mxu0 %v294
  %1489 = vmatpush.msra.mxu0 %v290
  %1490 = vmatpush.msra.mxu0 %v286
  %1491 = vmatpush.msra.mxu0 %v282
  %1492 = vmatpush.msra.mxu0 %v278
  %1493 = vmatmul.f32.gmra.mxu0 %v1409
  %v1494 = vpop.f32.mrf.mxu0
  %v1495 = vadd.f32 0.0, %v1494
  %1496 = vdwg.mxu0
  %v1497 = vadd.f32 %v1413, %v1435
  %v1498 = vadd.f32 %v1414, %v1455
  %v1499 = vadd.f32 %v1415, %v1475
  %v1500 = vadd.f32 %v1416, %v1495
  %v1501 = vxor.u32 %v1497, 2147483648
  %v1502 = vmul.f32 %v1501, 1.442695
  %v1503 = vpow.pop %v1502
  %v1504 = vadd.f32 %v1503, 1.0
  %v1505 = vrcp.pop %v1504
  %v1506 = vmul.f32 %v1504, %v1505
  %v1507 = vsub.f32 1.0, %v1506
  %v1508 = vmul.f32 %v1505, %v1507
  %v1509 = vadd.f32 %v1505, %v1508
  %vm1510 = vweird.f32 %v1504
  %vm1511 = vweird.f32 %v1505
  %vm1512 = vmor %vm1510, %vm1511
  %v1513 = vsel %vm1512, %v1505, %v1509
  %v1514 = vand.u32 2147483647, %v1504
  %vm1515 = vcmp.eq.f32.partialorder %v1514, 8.507059e+37
  %v1516 = vand.u32 %v1504, 2147483648
  %v1517 = vor.u32 1.1754944e-38, %v1516
  %v1518 = vsel %vm1515, %v1517, %v1513
  %v1519 = vmul.f32 1.0, %v1518
  %v1520 = vxor.u32 %v1498, 2147483648
  %v1521 = vmul.f32 %v1520, 1.442695
  %v1522 = vpow.pop %v1521
  %v1523 = vadd.f32 %v1522, 1.0
  %v1524 = vrcp.pop %v1523
  %v1525 = vmul.f32 %v1523, %v1524
  %v1526 = vsub.f32 1.0, %v1525
  %v1527 = vmul.f32 %v1524, %v1526
  %v1528 = vadd.f32 %v1524, %v1527
  %vm1529 = vweird.f32 %v1523
  %vm1530 = vweird.f32 %v1524
  %vm1531 = vmor %vm1529, %vm1530
  %v1532 = vsel %vm1531, %v1524, %v1528
  %v1533 = vand.u32 2147483647, %v1523
  %vm1534 = vcmp.eq.f32.partialorder %v1533, 8.507059e+37
  %v1535 = vand.u32 %v1523, 2147483648
  %v1536 = vor.u32 1.1754944e-38, %v1535
  %v1537 = vsel %vm1534, %v1536, %v1532
  %v1538 = vmul.f32 1.0, %v1537
  %v1539 = vtanh.pop %v1499
  %v1540 = vxor.u32 %v1500, 2147483648
  %v1541 = vmul.f32 %v1540, 1.442695
  %v1542 = vpow.pop %v1541
  %v1543 = vadd.f32 %v1542, 1.0
  %v1544 = vrcp.pop %v1543
  %v1545 = vmul.f32 %v1543, %v1544
  %v1546 = vsub.f32 1.0, %v1545
  %v1547 = vmul.f32 %v1544, %v1546
  %v1548 = vadd.f32 %v1544, %v1547
  %vm1549 = vweird.f32 %v1543
  %vm1550 = vweird.f32 %v1544
  %vm1551 = vmor %vm1549, %vm1550
  %v1552 = vsel %vm1551, %v1544, %v1548
  %v1553 = vand.u32 2147483647, %v1543
  %vm1554 = vcmp.eq.f32.partialorder %v1553, 8.507059e+37
  %v1555 = vand.u32 %v1543, 2147483648
  %v1556 = vor.u32 1.1754944e-38, %v1555
  %v1557 = vsel %vm1554, %v1556, %v1552
  %v1558 = vmul.f32 1.0, %v1557
  %v1559 = vmul.f32 %v1538, %v1407
  %v1560 = vmul.f32 %v1519, %v1539
  %v1561 = vadd.f32 %v1559, %v1560
  %v1562 = vtanh.pop %v1561
  %v1563 = vmul.f32 %v1558, %v1562
  %1564 = vst [vmem:[#allocation3] sm:$0xff] %v1563
  %1565 = vst [vmem:[#allocation4] sm:$0xff] %v1561
  // Predicated region
  $region22: #{lstm_model_forward.1} parent=0 // pred_check
    %p1566 = pneg %p17
  $region23: #{lstm_model_forward.1} parent=0 // pred_check_branch
    %1568 = sbr.rel (%p1566) target = $region25
  $region24: #{lstm_model_forward.1} parent=0 // pred_region
    %1569 = vst [vmem:[%s4] sm:$0xff] %v1563
  $region25: #{lstm_model_forward.1} parent=0 // pred_fallthru
    _
  // Predicated region
  $region26: #{lstm_model_forward.1} parent=0 // pred_check
    _
  $region27: #{lstm_model_forward.1} parent=0 // pred_check_branch
    %1571 = sbr.rel (0) target = $region29
  $region28: #{lstm_model_forward.1} parent=0 // pred_region
    _
  $region29: #{lstm_model_forward.1} parent=0 // pred_fallthru
    _
  // Predicated region
  $region30: #{lstm_model_forward.1} parent=0 // pred_check
    _
  $region31: #{lstm_model_forward.1} parent=0 // pred_check_branch
    %1573 = sbr.rel (0) target = $region33
  $region32: #{lstm_model_forward.1} parent=0 // pred_region
    _
  $region33: #{lstm_model_forward.1} parent=0 // pred_fallthru
    _

</llo_original>
